<compile_context>
chip_gen: v5e
topology: v5e:2x2
jax: 0.10.0
libtpu: 0.0.40
codegen_flags: <defaults>
</compile_context>

<pallas_src>
import functools

import jax
import jax.numpy as jnp
from jax import lax
from jax.experimental import pallas as pl
from jax.experimental.pallas import tpu as pltpu

KS_CONTEXT = [1, 3, 5, 7]
KS_ASPECT = [1, 1, 2, 2]


# ----------------------------------------------------------------------------
# The fused kernel.
# ----------------------------------------------------------------------------
def _fused_gc_kernel(L, ctx_ref, asp_ref,
                     w1c_ref, b1c_ref, w2c_ref, b2c_ref,
                     w1a_ref, b1a_ref, w2a_ref, b2a_ref,
                     wd_ref, bd_ref, o_ref):
    M, _ = ctx_ref.shape            # M = batch_block * L (batch folded into M)
    NC = w1c_ref.shape[2]           # 8 * in_channels (lane-dense, 128 here)
    Bt = M // L

    # Constant causal-shift matrices built from iotas and applied on the MXU:
    #   (S_s @ x)[t] = x[t - s] within each length-L sequence of the flattened
    #   (Bt*L, .) tile, and exactly 0 where the shift crosses the t<0 boundary
    #   (== the ConstantPad2d zeros) or a sequence boundary.
    ri = lax.broadcasted_iota(jnp.int32, (M, M), 0)
    ci = lax.broadcasted_iota(jnp.int32, (M, M), 1)
    ri_in_seq = ri % L
    shift_mats = {}                 # Python-level cache; taps are unrolled

    def shift_rows(x, s):
        if s == 0:
            return x
        if s not in shift_mats:
            shift_mats[s] = jnp.where(
                (ri - ci == s) & (ri_in_seq >= s), 1.0, 0.0
            ).astype(jnp.float32)
        return jnp.dot(shift_mats[s], x, preferred_element_type=jnp.float32)

    def causal_conv(x, w_ref, b_ref):
        # x: (M, K_in); w_ref: (T, K_in, NC) packs all 8 conv layers of this
        # input (4 kernel sizes x 2 branches, right-aligned in the tap window)
        # -> one lane-dense (N = NC = 128) matmul per tap.
        T = w_ref.shape[0]
        n_out = w_ref.shape[2]
        acc = jnp.zeros((M, n_out), jnp.float32)
        for j in range(T):                       # T is static -> unrolled
            xs = shift_rows(x, (T - 1) - j)
            acc = acc + jnp.dot(xs, w_ref[j],
                                preferred_element_type=jnp.float32)
        return acc + b_ref[...]                  # (1, NC) broadcast

    xc = ctx_ref[...]
    xa = asp_ref[...]

    # Two stacked causal convs per input; Dropout(0.35) between them is
    # identity in eval mode.  Lane packing of the outputs:
    #   yc = [cnn_context  k0..k3 | cnn_context_ k0..k3]
    #   ya = [cnn_aspect   k0..k3 | cnn_aspect_  k0..k3]
    yc = causal_conv(causal_conv(xc, w1c_ref, b1c_ref), w2c_ref, b2c_ref)
    ya = causal_conv(causal_conv(xa, w1a_ref, b1a_ref), w2a_ref, b2a_ref)

    # Gating: s1 = tanh(c)*sigmoid(a + c_), s2 = tanh(a)*sigmoid(c + a_),
    # computed fully 128-lane dense via two half-width lane rolls + a select.
    half = NC // 2
    lane = lax.broadcasted_iota(jnp.int32, (M, NC), 1)
    ycr = pltpu.roll(yc, shift=half, axis=1)      # halves swapped: [c_ | c]
    yar = pltpu.roll(ya, shift=half, axis=1)      # [a_ | a]
    tanh_in = jnp.where(lane < half, yc, yar)     # [c  | a]
    gated = jnp.tanh(tanh_in) * jax.nn.sigmoid(ya + ycr)   # [s1_0..3 | s2_0..3]

    # Max-pool over the sequence dim, then a single (Bt, 128) @ (128, P) head.
    pooled = jnp.max(gated.reshape(Bt, L, NC), axis=1)     # (Bt, NC)
    out = jnp.dot(pooled, wd_ref[...], preferred_element_type=jnp.float32)
    o_ref[...] = (out + bd_ref[...]).astype(o_ref.dtype)


def _fused_forward(context, aspect, pc, pa, dense_w, dense_b,
                   *, batch_block=None):
    B, L, D = context.shape
    NC = pc["w1"].shape[2]
    P = dense_w.shape[1]
    Tc = pc["w1"].shape[0]
    Ta = pa["w1"].shape[0]
    if batch_block is None:
        batch_block = B                      # one grid step at demo sizes
    assert B % batch_block == 0
    Mb = batch_block * L

    ctx2d = context.reshape(B * L, D)        # glue reshape (free in XLA)
    asp2d = aspect.reshape(B * L, D)

    kernel = functools.partial(_fused_gc_kernel, L)

    return pl.pallas_call(
        kernel,
        out_shape=jax.ShapeDtypeStruct((B, P), jnp.float32),
        grid=(B // batch_block,),
        in_specs=[
            pl.BlockSpec((Mb, D), lambda b: (b, 0)),          # context rows
            pl.BlockSpec((Mb, D), lambda b: (b, 0)),          # aspect rows
            pl.BlockSpec((Tc, D, NC), lambda b: (0, 0, 0)),   # ctx layer-1 W
            pl.BlockSpec((1, NC), lambda b: (0, 0)),          # ctx layer-1 b
            pl.BlockSpec((Tc, NC, NC), lambda b: (0, 0, 0)),  # ctx layer-2 W
            pl.BlockSpec((1, NC), lambda b: (0, 0)),          # ctx layer-2 b
            pl.BlockSpec((Ta, D, NC), lambda b: (0, 0, 0)),   # asp layer-1 W
            pl.BlockSpec((1, NC), lambda b: (0, 0)),          # asp layer-1 b
            pl.BlockSpec((Ta, NC, NC), lambda b: (0, 0, 0)),  # asp layer-2 W
            pl.BlockSpec((1, NC), lambda b: (0, 0)),          # asp layer-2 b
            pl.BlockSpec((NC, P), lambda b: (0, 0)),          # dense W
            pl.BlockSpec((1, P), lambda b: (0, 0)),           # dense b
        ],
        out_specs=pl.BlockSpec((batch_block, P), lambda b: (b, 0)),
        compiler_params=pltpu.CompilerParams(
            dimension_semantics=("parallel",)),
    )(ctx2d, asp2d, pc["w1"], pc["b1"], pc["w2"], pc["b2"],
      pa["w1"], pa["b1"], pa["w2"], pa["b2"], dense_w, dense_b)


# ----------------------------------------------------------------------------
# Parameter init + lane-dense packing (done once, host side).
# ----------------------------------------------------------------------------
def _pack_conv_group(blocks, ks, D, C):
    """Pack 8 cnn_layer blocks (2 branches x 4 kernel sizes, same input) into
    tap-major, lane-dense weights.  Smaller kernels are right-aligned inside
    the shared tap window (leading taps zero), reproducing the causal
    ConstantPad2d + Conv2d((k,1)) semantics; layer 2 is block-diagonal."""
    n = len(blocks)
    T = max(ks)
    w1 = jnp.zeros((T, D, n * C), jnp.float32)
    w2 = jnp.zeros((T, n * C, n * C), jnp.float32)
    b1 = jnp.zeros((1, n * C), jnp.float32)
    b2 = jnp.zeros((1, n * C), jnp.float32)
    for i, (p, k) in enumerate(zip(blocks, ks)):
        lo, hi = i * C, (i + 1) * C
        w1 = w1.at[T - k:, :, lo:hi].set(p["w1"])
        w2 = w2.at[T - k:, lo:hi, lo:hi].set(p["w2"])
        b1 = b1.at[:, lo:hi].set(p["b1"].reshape(1, C))
        b2 = b2.at[:, lo:hi].set(p["b2"].reshape(1, C))
    return {"w1": w1, "b1": b1, "w2": w2, "b2": b2}


def init_params(key, vocab, pos_vocab, embed_dim, pos_dim, in_channels,
                polarities):
    D = embed_dim + pos_dim
    C = in_channels
    keys = iter(jax.random.split(key, 80))
    nrm = lambda shape: 0.1 * jax.random.normal(next(keys), shape, jnp.float32)

    def conv_block(k):
        return {
            "w1": nrm((k, D, C)),     # == torch Conv2d weight[:, :, j, 0].T
            "b1": nrm((1, C)),
            "w2": nrm((k, C, C)),
            "b2": nrm((1, C)),
        }

    params = {
        "embedding": nrm((vocab, embed_dim)),
        "pos_embedding": nrm((pos_vocab, pos_dim)),
        "cnn_context": [conv_block(k) for k in KS_CONTEXT],
        "cnn_context_": [conv_block(k) for k in KS_CONTEXT],
        "cnn_aspect": [conv_block(k) for k in KS_ASPECT],
        "cnn_aspect_": [conv_block(k) for k in KS_ASPECT],
        # torch Linear: out = x @ W.T + b with x = [res1 | res2]; we store W.T.
        "dense_w": nrm((8 * C, polarities)),
        "dense_b": nrm((1, polarities)),
    }
    # lane-dense packed weights consumed by the fused Pallas kernel
    params["packed_ctx"] = _pack_conv_group(
        params["cnn_context"] + params["cnn_context_"], KS_CONTEXT * 2, D, C)
    params["packed_asp"] = _pack_conv_group(
        params["cnn_aspect"] + params["cnn_aspect_"], KS_ASPECT * 2, D, C)
    return params


# ----------------------------------------------------------------------------
# Forward pass.
# ----------------------------------------------------------------------------
def gc_embed1_forward(params, inputs, *, batch_block=None):
    text_idx, aspect_idx, pos_idx, aspect_pos_idx = inputs
    emb, pos = params["embedding"], params["pos_embedding"]
    # glue: embedding gathers + feature concat, (B, L, D) feature-last layout
    context = jnp.concatenate([emb[text_idx], pos[pos_idx]], axis=-1)
    aspect = jnp.concatenate([emb[aspect_idx], pos[aspect_pos_idx]], axis=-1)
    assert context.shape == aspect.shape  # gating requires equal seq lengths
    return _fused_forward(context, aspect, params["packed_ctx"],
                          params["packed_asp"], params["dense_w"],
                          params["dense_b"], batch_block=batch_block)


# ----------------------------------------------------------------------------
# Pure-JAX reference (uses the raw per-block params) for a sanity check.
# ----------------------------------------------------------------------------
def _ref_conv_block(x, p, k):
    L = x.shape[1]
    xp = jnp.pad(x, ((0, 0), (k - 1, 0), (0, 0)))
    y1 = sum(jnp.einsum("bld,dc->blc", xp[:, j:j + L], p["w1"][j])
             for j in range(k)) + p["b1"][None]
    y1p = jnp.pad(y1, ((0, 0), (k - 1, 0), (0, 0)))
    y2 = sum(jnp.einsum("bld,dc->blc", y1p[:, j:j + L], p["w2"][j])
             for j in range(k)) + p["b2"][None]
    return y2


def _ref_forward(params, inputs):
    text_idx, aspect_idx, pos_idx, aspect_pos_idx = inputs
    emb, pos = params["embedding"], params["pos_embedding"]
    context = jnp.concatenate([emb[text_idx], pos[pos_idx]], axis=-1)
    aspect = jnp.concatenate([emb[aspect_idx], pos[aspect_pos_idx]], axis=-1)
    ctx = [_ref_conv_block(context, p, k)
           for p, k in zip(params["cnn_context"], KS_CONTEXT)]
    ctx_ = [_ref_conv_block(context, p, k)
            for p, k in zip(params["cnn_context_"], KS_CONTEXT)]
    asp = [_ref_conv_block(aspect, p, k)
           for p, k in zip(params["cnn_aspect"], KS_ASPECT)]
    asp_ = [_ref_conv_block(aspect, p, k)
            for p, k in zip(params["cnn_aspect_"], KS_ASPECT)]
    r1 = [jnp.max(jnp.tanh(c) * jax.nn.sigmoid(a + cp), axis=1)
          for c, a, cp in zip(ctx, asp, ctx_)]
    r2 = [jnp.max(jnp.tanh(a) * jax.nn.sigmoid(c + ap), axis=1)
          for c, a, ap in zip(ctx, asp, asp_)]
    x = jnp.concatenate(r1 + r2, axis=-1)
    return x @ params["dense_w"] + params["dense_b"]


if __name__ == "__main__":
    B, L = 2, 8                 # batch, sequence length (context == aspect len)
    vocab, pos_vocab = 20, 10
    embed_dim, pos_dim = 32, 8  # opt.embed_dim becomes 40 after += pos_dim
    in_channels = 16            # opt.in_channels -> 8*C = 128 lane-dense
    polarities = 3              # opt.polarities_dim

    key = jax.random.PRNGKey(0)
    k_params, k_data = jax.random.split(key)
    params = init_params(k_params, vocab, pos_vocab, embed_dim, pos_dim,
                         in_channels, polarities)

    kt, ka, kp, kap = jax.random.split(k_data, 4)
    text_idx = jax.random.randint(kt, (B, L), 0, vocab)
    aspect_idx = jax.random.randint(ka, (B, L), 0, vocab)
    pos_idx = jax.random.randint(kp, (B, L), 0, pos_vocab)
    aspect_pos_idx = jax.random.randint(kap, (B, L), 0, pos_vocab)
    inputs = (text_idx, aspect_idx, pos_idx, aspect_pos_idx)

    out = gc_embed1_forward(params, inputs)
    out = jax.block_until_ready(out)
    assert out.shape == (B, polarities), out.shape

    ref = jax.block_until_ready(_ref_forward(params, inputs))
    assert jnp.allclose(out, ref, atol=1e-3, rtol=1e-3), (out, ref)

    print("KERNEL_OK")
</pallas_src>

<mosaic_0001>
module attributes {stable_mosaic.version = 11 : i64} {
  func.func @_fused_gc_kernel(%arg0: i32, %arg1: memref<16x40xf32, #tpu.memory_space<vmem>>, %arg2: memref<16x40xf32, #tpu.memory_space<vmem>>, %arg3: memref<7x40x128xf32, #tpu.memory_space<vmem>>, %arg4: memref<1x128xf32, #tpu.memory_space<vmem>>, %arg5: memref<7x128x128xf32, #tpu.memory_space<vmem>>, %arg6: memref<1x128xf32, #tpu.memory_space<vmem>>, %arg7: memref<2x40x128xf32, #tpu.memory_space<vmem>>, %arg8: memref<1x128xf32, #tpu.memory_space<vmem>>, %arg9: memref<2x128x128xf32, #tpu.memory_space<vmem>>, %arg10: memref<1x128xf32, #tpu.memory_space<vmem>>, %arg11: memref<128x3xf32, #tpu.memory_space<vmem>>, %arg12: memref<1x3xf32, #tpu.memory_space<vmem>>, %arg13: memref<2x3xf32, #tpu.memory_space<vmem>>) attributes {dimension_semantics = [#tpu.dimension_semantics<parallel>], iteration_bounds = array<i64: 1>, scalar_prefetch = 0 : i64, scratch_operands = 0 : i64, tpu.core_type = #tpu.core_type<tc>, window_params = [{transform_indices = @transform_0, window_bounds = array<i64: 16, 40>}, {transform_indices = @transform_1, window_bounds = array<i64: 16, 40>}, {pipeline_mode = #tpu.pipeline_mode<synchronous>, transform_indices = @transform_2, window_bounds = array<i64: 7, 40, 128>}, {pipeline_mode = #tpu.pipeline_mode<synchronous>, transform_indices = @transform_3, window_bounds = array<i64: 1, 128>}, {pipeline_mode = #tpu.pipeline_mode<synchronous>, transform_indices = @transform_4, window_bounds = array<i64: 7, 128, 128>}, {pipeline_mode = #tpu.pipeline_mode<synchronous>, transform_indices = @transform_5, window_bounds = array<i64: 1, 128>}, {pipeline_mode = #tpu.pipeline_mode<synchronous>, transform_indices = @transform_6, window_bounds = array<i64: 2, 40, 128>}, {pipeline_mode = #tpu.pipeline_mode<synchronous>, transform_indices = @transform_7, window_bounds = array<i64: 1, 128>}, {pipeline_mode = #tpu.pipeline_mode<synchronous>, transform_indices = @transform_8, window_bounds = array<i64: 2, 128, 128>}, {pipeline_mode = #tpu.pipeline_mode<synchronous>, transform_indices = @transform_9, window_bounds = array<i64: 1, 128>}, {pipeline_mode = #tpu.pipeline_mode<synchronous>, transform_indices = @transform_10, window_bounds = array<i64: 128, 3>}, {pipeline_mode = #tpu.pipeline_mode<synchronous>, transform_indices = @transform_11, window_bounds = array<i64: 1, 3>}, {transform_indices = @transform_12, window_bounds = array<i64: 2, 3>}]} {
    %0 = tpu.iota {dimensions = array<i32: 0>} : vector<16x16xi32>
    %1 = tpu.iota {dimensions = array<i32: 1>} : vector<16x16xi32>
    %c8_i32 = arith.constant 8 : i32
    %c0_i32 = arith.constant 0 : i32
    %2 = arith.cmpi eq, %c8_i32, %c0_i32 : i32
    %c1_i32 = arith.constant 1 : i32
    %3 = arith.select %2, %c1_i32, %c8_i32 : i32
    %4 = vector.broadcast %3 : i32 to vector<16x16xi32>
    %5 = arith.remsi %0, %4 : vector<16x16xi32>
    %c0_i32_0 = arith.constant 0 : i32
    %6 = vector.broadcast %c0_i32_0 : i32 to vector<16x16xi32>
    %7 = arith.cmpi ne, %5, %6 : vector<16x16xi32>
    %c0_i32_1 = arith.constant 0 : i32
    %8 = vector.broadcast %c0_i32_1 : i32 to vector<16x16xi32>
    %9 = arith.cmpi slt, %5, %8 : vector<16x16xi32>
    %c0_i32_2 = arith.constant 0 : i32
    %10 = arith.cmpi slt, %3, %c0_i32_2 : i32
    %11 = vector.broadcast %10 : i1 to vector<16x16xi1>
    %12 = vector.broadcast %11 : vector<16x16xi1> to vector<16x16xi1>
    %13 = arith.xori %9, %12 : vector<16x16xi1>
    %14 = arith.andi %13, %7 : vector<16x16xi1>
    %15 = vector.broadcast %3 : i32 to vector<16x16xi32>
    %16 = arith.addi %5, %15 : vector<16x16xi32>
    %17 = arith.select %14, %16, %5 : vector<16x16xi1>, vector<16x16xi32>
    %c0 = arith.constant 0 : index
    %c0_3 = arith.constant 0 : index
    %18 = vector.load %arg1[%c0, %c0_3] : memref<16x40xf32, #tpu.memory_space<vmem>>, vector<16x40xf32>
    %c0_4 = arith.constant 0 : index
    %c0_5 = arith.constant 0 : index
    %19 = vector.load %arg2[%c0_4, %c0_5] : memref<16x40xf32, #tpu.memory_space<vmem>>, vector<16x40xf32>
    %cst = arith.constant 0.000000e+00 : f32
    %20 = vector.broadcast %cst : f32 to vector<16x128xf32>
    %21 = arith.subi %0, %1 : vector<16x16xi32>
    %c6_i32 = arith.constant 6 : i32
    %22 = vector.broadcast %c6_i32 : i32 to vector<16x16xi32>
    %23 = arith.cmpi eq, %21, %22 : vector<16x16xi32>
    %c6_i32_6 = arith.constant 6 : i32
    %24 = vector.broadcast %c6_i32_6 : i32 to vector<16x16xi32>
    %25 = arith.cmpi sge, %17, %24 : vector<16x16xi32>
    %26 = arith.andi %23, %25 : vector<16x16xi1>
    %cst_7 = arith.constant 1.000000e+00 : f32
    %cst_8 = arith.constant 0.000000e+00 : f32
    %27 = vector.broadcast %cst_7 : f32 to vector<16x16xf32>
    %28 = vector.broadcast %cst_8 : f32 to vector<16x16xf32>
    %29 = arith.select %26, %27, %28 : vector<16x16xi1>, vector<16x16xf32>
    %cst_9 = arith.constant dense<0.000000e+00> : vector<16x40xf32>
    %30 = tpu.matmul %29, %18, %cst_9 {dimension_numbers = #tpu.dot_dimension_numbers<[1], [0], [0], [1], [0, 0, 1, 1], [], []>} : vector<16x16xf32>, vector<16x40xf32>, vector<16x40xf32> -> vector<16x40xf32>
    %c0_10 = arith.constant 0 : index
    %c0_11 = arith.constant 0 : index
    %c0_12 = arith.constant 0 : index
    %31 = vector.load %arg3[%c0_10, %c0_11, %c0_12] : memref<7x40x128xf32, #tpu.memory_space<vmem>>, vector<1x40x128xf32>
    %32 = vector.shape_cast %31 : vector<1x40x128xf32> to vector<40x128xf32>
    %cst_13 = arith.constant dense<0.000000e+00> : vector<16x128xf32>
    %33 = tpu.matmul %30, %32, %cst_13 {dimension_numbers = #tpu.dot_dimension_numbers<[1], [0], [0], [1], [0, 0, 1, 1], [], []>} : vector<16x40xf32>, vector<40x128xf32>, vector<16x128xf32> -> vector<16x128xf32>
    %34 = arith.addf %20, %33 : vector<16x128xf32>
    %35 = arith.subi %0, %1 : vector<16x16xi32>
    %c5_i32 = arith.constant 5 : i32
    %36 = vector.broadcast %c5_i32 : i32 to vector<16x16xi32>
    %37 = arith.cmpi eq, %35, %36 : vector<16x16xi32>
    %c5_i32_14 = arith.constant 5 : i32
    %38 = vector.broadcast %c5_i32_14 : i32 to vector<16x16xi32>
    %39 = arith.cmpi sge, %17, %38 : vector<16x16xi32>
    %40 = arith.andi %37, %39 : vector<16x16xi1>
    %cst_15 = arith.constant 1.000000e+00 : f32
    %cst_16 = arith.constant 0.000000e+00 : f32
    %41 = vector.broadcast %cst_15 : f32 to vector<16x16xf32>
    %42 = vector.broadcast %cst_16 : f32 to vector<16x16xf32>
    %43 = arith.select %40, %41, %42 : vector<16x16xi1>, vector<16x16xf32>
    %cst_17 = arith.constant dense<0.000000e+00> : vector<16x40xf32>
    %44 = tpu.matmul %43, %18, %cst_17 {dimension_numbers = #tpu.dot_dimension_numbers<[1], [0], [0], [1], [0, 0, 1, 1], [], []>} : vector<16x16xf32>, vector<16x40xf32>, vector<16x40xf32> -> vector<16x40xf32>
    %c1 = arith.constant 1 : index
    %c0_18 = arith.constant 0 : index
    %c0_19 = arith.constant 0 : index
    %45 = vector.load %arg3[%c1, %c0_18, %c0_19] : memref<7x40x128xf32, #tpu.memory_space<vmem>>, vector<1x40x128xf32>
    %46 = vector.shape_cast %45 : vector<1x40x128xf32> to vector<40x128xf32>
    %cst_20 = arith.constant dense<0.000000e+00> : vector<16x128xf32>
    %47 = tpu.matmul %44, %46, %cst_20 {dimension_numbers = #tpu.dot_dimension_numbers<[1], [0], [0], [1], [0, 0, 1, 1], [], []>} : vector<16x40xf32>, vector<40x128xf32>, vector<16x128xf32> -> vector<16x128xf32>
    %48 = arith.addf %34, %47 : vector<16x128xf32>
    %49 = arith.subi %0, %1 : vector<16x16xi32>
    %c4_i32 = arith.constant 4 : i32
    %50 = vector.broadcast %c4_i32 : i32 to vector<16x16xi32>
    %51 = arith.cmpi eq, %49, %50 : vector<16x16xi32>
    %c4_i32_21 = arith.constant 4 : i32
    %52 = vector.broadcast %c4_i32_21 : i32 to vector<16x16xi32>
    %53 = arith.cmpi sge, %17, %52 : vector<16x16xi32>
    %54 = arith.andi %51, %53 : vector<16x16xi1>
    %cst_22 = arith.constant 1.000000e+00 : f32
    %cst_23 = arith.constant 0.000000e+00 : f32
    %55 = vector.broadcast %cst_22 : f32 to vector<16x16xf32>
    %56 = vector.broadcast %cst_23 : f32 to vector<16x16xf32>
    %57 = arith.select %54, %55, %56 : vector<16x16xi1>, vector<16x16xf32>
    %cst_24 = arith.constant dense<0.000000e+00> : vector<16x40xf32>
    %58 = tpu.matmul %57, %18, %cst_24 {dimension_numbers = #tpu.dot_dimension_numbers<[1], [0], [0], [1], [0, 0, 1, 1], [], []>} : vector<16x16xf32>, vector<16x40xf32>, vector<16x40xf32> -> vector<16x40xf32>
    %c2 = arith.constant 2 : index
    %c0_25 = arith.constant 0 : index
    %c0_26 = arith.constant 0 : index
    %59 = vector.load %arg3[%c2, %c0_25, %c0_26] : memref<7x40x128xf32, #tpu.memory_space<vmem>>, vector<1x40x128xf32>
    %60 = vector.shape_cast %59 : vector<1x40x128xf32> to vector<40x128xf32>
    %cst_27 = arith.constant dense<0.000000e+00> : vector<16x128xf32>
    %61 = tpu.matmul %58, %60, %cst_27 {dimension_numbers = #tpu.dot_dimension_numbers<[1], [0], [0], [1], [0, 0, 1, 1], [], []>} : vector<16x40xf32>, vector<40x128xf32>, vector<16x128xf32> -> vector<16x128xf32>
    %62 = arith.addf %48, %61 : vector<16x128xf32>
    %63 = arith.subi %0, %1 : vector<16x16xi32>
    %c3_i32 = arith.constant 3 : i32
    %64 = vector.broadcast %c3_i32 : i32 to vector<16x16xi32>
    %65 = arith.cmpi eq, %63, %64 : vector<16x16xi32>
    %c3_i32_28 = arith.constant 3 : i32
    %66 = vector.broadcast %c3_i32_28 : i32 to vector<16x16xi32>
    %67 = arith.cmpi sge, %17, %66 : vector<16x16xi32>
    %68 = arith.andi %65, %67 : vector<16x16xi1>
    %cst_29 = arith.constant 1.000000e+00 : f32
    %cst_30 = arith.constant 0.000000e+00 : f32
    %69 = vector.broadcast %cst_29 : f32 to vector<16x16xf32>
    %70 = vector.broadcast %cst_30 : f32 to vector<16x16xf32>
    %71 = arith.select %68, %69, %70 : vector<16x16xi1>, vector<16x16xf32>
    %cst_31 = arith.constant dense<0.000000e+00> : vector<16x40xf32>
    %72 = tpu.matmul %71, %18, %cst_31 {dimension_numbers = #tpu.dot_dimension_numbers<[1], [0], [0], [1], [0, 0, 1, 1], [], []>} : vector<16x16xf32>, vector<16x40xf32>, vector<16x40xf32> -> vector<16x40xf32>
    %c3 = arith.constant 3 : index
    %c0_32 = arith.constant 0 : index
    %c0_33 = arith.constant 0 : index
    %73 = vector.load %arg3[%c3, %c0_32, %c0_33] : memref<7x40x128xf32, #tpu.memory_space<vmem>>, vector<1x40x128xf32>
    %74 = vector.shape_cast %73 : vector<1x40x128xf32> to vector<40x128xf32>
    %cst_34 = arith.constant dense<0.000000e+00> : vector<16x128xf32>
    %75 = tpu.matmul %72, %74, %cst_34 {dimension_numbers = #tpu.dot_dimension_numbers<[1], [0], [0], [1], [0, 0, 1, 1], [], []>} : vector<16x40xf32>, vector<40x128xf32>, vector<16x128xf32> -> vector<16x128xf32>
    %76 = arith.addf %62, %75 : vector<16x128xf32>
    %77 = arith.subi %0, %1 : vector<16x16xi32>
    %c2_i32 = arith.constant 2 : i32
    %78 = vector.broadcast %c2_i32 : i32 to vector<16x16xi32>
    %79 = arith.cmpi eq, %77, %78 : vector<16x16xi32>
    %c2_i32_35 = arith.constant 2 : i32
    %80 = vector.broadcast %c2_i32_35 : i32 to vector<16x16xi32>
    %81 = arith.cmpi sge, %17, %80 : vector<16x16xi32>
    %82 = arith.andi %79, %81 : vector<16x16xi1>
    %cst_36 = arith.constant 1.000000e+00 : f32
    %cst_37 = arith.constant 0.000000e+00 : f32
    %83 = vector.broadcast %cst_36 : f32 to vector<16x16xf32>
    %84 = vector.broadcast %cst_37 : f32 to vector<16x16xf32>
    %85 = arith.select %82, %83, %84 : vector<16x16xi1>, vector<16x16xf32>
    %cst_38 = arith.constant dense<0.000000e+00> : vector<16x40xf32>
    %86 = tpu.matmul %85, %18, %cst_38 {dimension_numbers = #tpu.dot_dimension_numbers<[1], [0], [0], [1], [0, 0, 1, 1], [], []>} : vector<16x16xf32>, vector<16x40xf32>, vector<16x40xf32> -> vector<16x40xf32>
    %c4 = arith.constant 4 : index
    %c0_39 = arith.constant 0 : index
    %c0_40 = arith.constant 0 : index
    %87 = vector.load %arg3[%c4, %c0_39, %c0_40] : memref<7x40x128xf32, #tpu.memory_space<vmem>>, vector<1x40x128xf32>
    %88 = vector.shape_cast %87 : vector<1x40x128xf32> to vector<40x128xf32>
    %cst_41 = arith.constant dense<0.000000e+00> : vector<16x128xf32>
    %89 = tpu.matmul %86, %88, %cst_41 {dimension_numbers = #tpu.dot_dimension_numbers<[1], [0], [0], [1], [0, 0, 1, 1], [], []>} : vector<16x40xf32>, vector<40x128xf32>, vector<16x128xf32> -> vector<16x128xf32>
    %90 = arith.addf %76, %89 : vector<16x128xf32>
    %91 = arith.subi %0, %1 : vector<16x16xi32>
    %c1_i32_42 = arith.constant 1 : i32
    %92 = vector.broadcast %c1_i32_42 : i32 to vector<16x16xi32>
    %93 = arith.cmpi eq, %91, %92 : vector<16x16xi32>
    %c1_i32_43 = arith.constant 1 : i32
    %94 = vector.broadcast %c1_i32_43 : i32 to vector<16x16xi32>
    %95 = arith.cmpi sge, %17, %94 : vector<16x16xi32>
    %96 = arith.andi %93, %95 : vector<16x16xi1>
    %cst_44 = arith.constant 1.000000e+00 : f32
    %cst_45 = arith.constant 0.000000e+00 : f32
    %97 = vector.broadcast %cst_44 : f32 to vector<16x16xf32>
    %98 = vector.broadcast %cst_45 : f32 to vector<16x16xf32>
    %99 = arith.select %96, %97, %98 : vector<16x16xi1>, vector<16x16xf32>
    %cst_46 = arith.constant dense<0.000000e+00> : vector<16x40xf32>
    %100 = tpu.matmul %99, %18, %cst_46 {dimension_numbers = #tpu.dot_dimension_numbers<[1], [0], [0], [1], [0, 0, 1, 1], [], []>} : vector<16x16xf32>, vector<16x40xf32>, vector<16x40xf32> -> vector<16x40xf32>
    %c5 = arith.constant 5 : index
    %c0_47 = arith.constant 0 : index
    %c0_48 = arith.constant 0 : index
    %101 = vector.load %arg3[%c5, %c0_47, %c0_48] : memref<7x40x128xf32, #tpu.memory_space<vmem>>, vector<1x40x128xf32>
    %102 = vector.shape_cast %101 : vector<1x40x128xf32> to vector<40x128xf32>
    %cst_49 = arith.constant dense<0.000000e+00> : vector<16x128xf32>
    %103 = tpu.matmul %100, %102, %cst_49 {dimension_numbers = #tpu.dot_dimension_numbers<[1], [0], [0], [1], [0, 0, 1, 1], [], []>} : vector<16x40xf32>, vector<40x128xf32>, vector<16x128xf32> -> vector<16x128xf32>
    %104 = arith.addf %90, %103 : vector<16x128xf32>
    %c6 = arith.constant 6 : index
    %c0_50 = arith.constant 0 : index
    %c0_51 = arith.constant 0 : index
    %105 = vector.load %arg3[%c6, %c0_50, %c0_51] : memref<7x40x128xf32, #tpu.memory_space<vmem>>, vector<1x40x128xf32>
    %106 = vector.shape_cast %105 : vector<1x40x128xf32> to vector<40x128xf32>
    %cst_52 = arith.constant dense<0.000000e+00> : vector<16x128xf32>
    %107 = tpu.matmul %18, %106, %cst_52 {dimension_numbers = #tpu.dot_dimension_numbers<[1], [0], [0], [1], [0, 0, 1, 1], [], []>} : vector<16x40xf32>, vector<40x128xf32>, vector<16x128xf32> -> vector<16x128xf32>
    %108 = arith.addf %104, %107 : vector<16x128xf32>
    %c0_53 = arith.constant 0 : index
    %c0_54 = arith.constant 0 : index
    %109 = vector.load %arg4[%c0_53, %c0_54] : memref<1x128xf32, #tpu.memory_space<vmem>>, vector<1x128xf32>
    %110 = vector.broadcast %109 : vector<1x128xf32> to vector<16x128xf32>
    %111 = arith.addf %108, %110 : vector<16x128xf32>
    %cst_55 = arith.constant 0.000000e+00 : f32
    %112 = vector.broadcast %cst_55 : f32 to vector<16x128xf32>
    %cst_56 = arith.constant dense<0.000000e+00> : vector<16x128xf32>
    %113 = tpu.matmul %29, %111, %cst_56 {dimension_numbers = #tpu.dot_dimension_numbers<[1], [0], [0], [1], [0, 0, 1, 1], [], []>} : vector<16x16xf32>, vector<16x128xf32>, vector<16x128xf32> -> vector<16x128xf32>
    %c0_57 = arith.constant 0 : index
    %c0_58 = arith.constant 0 : index
    %c0_59 = arith.constant 0 : index
    %114 = vector.load %arg5[%c0_57, %c0_58, %c0_59] : memref<7x128x128xf32, #tpu.memory_space<vmem>>, vector<1x128x128xf32>
    %115 = vector.shape_cast %114 : vector<1x128x128xf32> to vector<128x128xf32>
    %cst_60 = arith.constant dense<0.000000e+00> : vector<16x128xf32>
    %116 = tpu.matmul %113, %115, %cst_60 {dimension_numbers = #tpu.dot_dimension_numbers<[1], [0], [0], [1], [0, 0, 1, 1], [], []>} : vector<16x128xf32>, vector<128x128xf32>, vector<16x128xf32> -> vector<16x128xf32>
    %117 = arith.addf %112, %116 : vector<16x128xf32>
    %cst_61 = arith.constant dense<0.000000e+00> : vector<16x128xf32>
    %118 = tpu.matmul %43, %111, %cst_61 {dimension_numbers = #tpu.dot_dimension_numbers<[1], [0], [0], [1], [0, 0, 1, 1], [], []>} : vector<16x16xf32>, vector<16x128xf32>, vector<16x128xf32> -> vector<16x128xf32>
    %c1_62 = arith.constant 1 : index
    %c0_63 = arith.constant 0 : index
    %c0_64 = arith.constant 0 : index
    %119 = vector.load %arg5[%c1_62, %c0_63, %c0_64] : memref<7x128x128xf32, #tpu.memory_space<vmem>>, vector<1x128x128xf32>
    %120 = vector.shape_cast %119 : vector<1x128x128xf32> to vector<128x128xf32>
    %cst_65 = arith.constant dense<0.000000e+00> : vector<16x128xf32>
    %121 = tpu.matmul %118, %120, %cst_65 {dimension_numbers = #tpu.dot_dimension_numbers<[1], [0], [0], [1], [0, 0, 1, 1], [], []>} : vector<16x128xf32>, vector<128x128xf32>, vector<16x128xf32> -> vector<16x128xf32>
    %122 = arith.addf %117, %121 : vector<16x128xf32>
    %cst_66 = arith.constant dense<0.000000e+00> : vector<16x128xf32>
    %123 = tpu.matmul %57, %111, %cst_66 {dimension_numbers = #tpu.dot_dimension_numbers<[1], [0], [0], [1], [0, 0, 1, 1], [], []>} : vector<16x16xf32>, vector<16x128xf32>, vector<16x128xf32> -> vector<16x128xf32>
    %c2_67 = arith.constant 2 : index
    %c0_68 = arith.constant 0 : index
    %c0_69 = arith.constant 0 : index
    %124 = vector.load %arg5[%c2_67, %c0_68, %c0_69] : memref<7x128x128xf32, #tpu.memory_space<vmem>>, vector<1x128x128xf32>
    %125 = vector.shape_cast %124 : vector<1x128x128xf32> to vector<128x128xf32>
    %cst_70 = arith.constant dense<0.000000e+00> : vector<16x128xf32>
    %126 = tpu.matmul %123, %125, %cst_70 {dimension_numbers = #tpu.dot_dimension_numbers<[1], [0], [0], [1], [0, 0, 1, 1], [], []>} : vector<16x128xf32>, vector<128x128xf32>, vector<16x128xf32> -> vector<16x128xf32>
    %127 = arith.addf %122, %126 : vector<16x128xf32>
    %cst_71 = arith.constant dense<0.000000e+00> : vector<16x128xf32>
    %128 = tpu.matmul %71, %111, %cst_71 {dimension_numbers = #tpu.dot_dimension_numbers<[1], [0], [0], [1], [0, 0, 1, 1], [], []>} : vector<16x16xf32>, vector<16x128xf32>, vector<16x128xf32> -> vector<16x128xf32>
    %c3_72 = arith.constant 3 : index
    %c0_73 = arith.constant 0 : index
    %c0_74 = arith.constant 0 : index
    %129 = vector.load %arg5[%c3_72, %c0_73, %c0_74] : memref<7x128x128xf32, #tpu.memory_space<vmem>>, vector<1x128x128xf32>
    %130 = vector.shape_cast %129 : vector<1x128x128xf32> to vector<128x128xf32>
    %cst_75 = arith.constant dense<0.000000e+00> : vector<16x128xf32>
    %131 = tpu.matmul %128, %130, %cst_75 {dimension_numbers = #tpu.dot_dimension_numbers<[1], [0], [0], [1], [0, 0, 1, 1], [], []>} : vector<16x128xf32>, vector<128x128xf32>, vector<16x128xf32> -> vector<16x128xf32>
    %132 = arith.addf %127, %131 : vector<16x128xf32>
    %cst_76 = arith.constant dense<0.000000e+00> : vector<16x128xf32>
    %133 = tpu.matmul %85, %111, %cst_76 {dimension_numbers = #tpu.dot_dimension_numbers<[1], [0], [0], [1], [0, 0, 1, 1], [], []>} : vector<16x16xf32>, vector<16x128xf32>, vector<16x128xf32> -> vector<16x128xf32>
    %c4_77 = arith.constant 4 : index
    %c0_78 = arith.constant 0 : index
    %c0_79 = arith.constant 0 : index
    %134 = vector.load %arg5[%c4_77, %c0_78, %c0_79] : memref<7x128x128xf32, #tpu.memory_space<vmem>>, vector<1x128x128xf32>
    %135 = vector.shape_cast %134 : vector<1x128x128xf32> to vector<128x128xf32>
    %cst_80 = arith.constant dense<0.000000e+00> : vector<16x128xf32>
    %136 = tpu.matmul %133, %135, %cst_80 {dimension_numbers = #tpu.dot_dimension_numbers<[1], [0], [0], [1], [0, 0, 1, 1], [], []>} : vector<16x128xf32>, vector<128x128xf32>, vector<16x128xf32> -> vector<16x128xf32>
    %137 = arith.addf %132, %136 : vector<16x128xf32>
    %cst_81 = arith.constant dense<0.000000e+00> : vector<16x128xf32>
    %138 = tpu.matmul %99, %111, %cst_81 {dimension_numbers = #tpu.dot_dimension_numbers<[1], [0], [0], [1], [0, 0, 1, 1], [], []>} : vector<16x16xf32>, vector<16x128xf32>, vector<16x128xf32> -> vector<16x128xf32>
    %c5_82 = arith.constant 5 : index
    %c0_83 = arith.constant 0 : index
    %c0_84 = arith.constant 0 : index
    %139 = vector.load %arg5[%c5_82, %c0_83, %c0_84] : memref<7x128x128xf32, #tpu.memory_space<vmem>>, vector<1x128x128xf32>
    %140 = vector.shape_cast %139 : vector<1x128x128xf32> to vector<128x128xf32>
    %cst_85 = arith.constant dense<0.000000e+00> : vector<16x128xf32>
    %141 = tpu.matmul %138, %140, %cst_85 {dimension_numbers = #tpu.dot_dimension_numbers<[1], [0], [0], [1], [0, 0, 1, 1], [], []>} : vector<16x128xf32>, vector<128x128xf32>, vector<16x128xf32> -> vector<16x128xf32>
    %142 = arith.addf %137, %141 : vector<16x128xf32>
    %c6_86 = arith.constant 6 : index
    %c0_87 = arith.constant 0 : index
    %c0_88 = arith.constant 0 : index
    %143 = vector.load %arg5[%c6_86, %c0_87, %c0_88] : memref<7x128x128xf32, #tpu.memory_space<vmem>>, vector<1x128x128xf32>
    %144 = vector.shape_cast %143 : vector<1x128x128xf32> to vector<128x128xf32>
    %cst_89 = arith.constant dense<0.000000e+00> : vector<16x128xf32>
    %145 = tpu.matmul %111, %144, %cst_89 {dimension_numbers = #tpu.dot_dimension_numbers<[1], [0], [0], [1], [0, 0, 1, 1], [], []>} : vector<16x128xf32>, vector<128x128xf32>, vector<16x128xf32> -> vector<16x128xf32>
    %146 = arith.addf %142, %145 : vector<16x128xf32>
    %c0_90 = arith.constant 0 : index
    %c0_91 = arith.constant 0 : index
    %147 = vector.load %arg6[%c0_90, %c0_91] : memref<1x128xf32, #tpu.memory_space<vmem>>, vector<1x128xf32>
    %148 = vector.broadcast %147 : vector<1x128xf32> to vector<16x128xf32>
    %149 = arith.addf %146, %148 : vector<16x128xf32>
    %cst_92 = arith.constant 0.000000e+00 : f32
    %150 = vector.broadcast %cst_92 : f32 to vector<16x128xf32>
    %cst_93 = arith.constant dense<0.000000e+00> : vector<16x40xf32>
    %151 = tpu.matmul %99, %19, %cst_93 {dimension_numbers = #tpu.dot_dimension_numbers<[1], [0], [0], [1], [0, 0, 1, 1], [], []>} : vector<16x16xf32>, vector<16x40xf32>, vector<16x40xf32> -> vector<16x40xf32>
    %c0_94 = arith.constant 0 : index
    %c0_95 = arith.constant 0 : index
    %c0_96 = arith.constant 0 : index
    %152 = vector.load %arg7[%c0_94, %c0_95, %c0_96] : memref<2x40x128xf32, #tpu.memory_space<vmem>>, vector<1x40x128xf32>
    %153 = vector.shape_cast %152 : vector<1x40x128xf32> to vector<40x128xf32>
    %cst_97 = arith.constant dense<0.000000e+00> : vector<16x128xf32>
    %154 = tpu.matmul %151, %153, %cst_97 {dimension_numbers = #tpu.dot_dimension_numbers<[1], [0], [0], [1], [0, 0, 1, 1], [], []>} : vector<16x40xf32>, vector<40x128xf32>, vector<16x128xf32> -> vector<16x128xf32>
    %155 = arith.addf %150, %154 : vector<16x128xf32>
    %c1_98 = arith.constant 1 : index
    %c0_99 = arith.constant 0 : index
    %c0_100 = arith.constant 0 : index
    %156 = vector.load %arg7[%c1_98, %c0_99, %c0_100] : memref<2x40x128xf32, #tpu.memory_space<vmem>>, vector<1x40x128xf32>
    %157 = vector.shape_cast %156 : vector<1x40x128xf32> to vector<40x128xf32>
    %cst_101 = arith.constant dense<0.000000e+00> : vector<16x128xf32>
    %158 = tpu.matmul %19, %157, %cst_101 {dimension_numbers = #tpu.dot_dimension_numbers<[1], [0], [0], [1], [0, 0, 1, 1], [], []>} : vector<16x40xf32>, vector<40x128xf32>, vector<16x128xf32> -> vector<16x128xf32>
    %159 = arith.addf %155, %158 : vector<16x128xf32>
    %c0_102 = arith.constant 0 : index
    %c0_103 = arith.constant 0 : index
    %160 = vector.load %arg8[%c0_102, %c0_103] : memref<1x128xf32, #tpu.memory_space<vmem>>, vector<1x128xf32>
    %161 = vector.broadcast %160 : vector<1x128xf32> to vector<16x128xf32>
    %162 = arith.addf %159, %161 : vector<16x128xf32>
    %cst_104 = arith.constant 0.000000e+00 : f32
    %163 = vector.broadcast %cst_104 : f32 to vector<16x128xf32>
    %cst_105 = arith.constant dense<0.000000e+00> : vector<16x128xf32>
    %164 = tpu.matmul %99, %162, %cst_105 {dimension_numbers = #tpu.dot_dimension_numbers<[1], [0], [0], [1], [0, 0, 1, 1], [], []>} : vector<16x16xf32>, vector<16x128xf32>, vector<16x128xf32> -> vector<16x128xf32>
    %c0_106 = arith.constant 0 : index
    %c0_107 = arith.constant 0 : index
    %c0_108 = arith.constant 0 : index
    %165 = vector.load %arg9[%c0_106, %c0_107, %c0_108] : memref<2x128x128xf32, #tpu.memory_space<vmem>>, vector<1x128x128xf32>
    %166 = vector.shape_cast %165 : vector<1x128x128xf32> to vector<128x128xf32>
    %cst_109 = arith.constant dense<0.000000e+00> : vector<16x128xf32>
    %167 = tpu.matmul %164, %166, %cst_109 {dimension_numbers = #tpu.dot_dimension_numbers<[1], [0], [0], [1], [0, 0, 1, 1], [], []>} : vector<16x128xf32>, vector<128x128xf32>, vector<16x128xf32> -> vector<16x128xf32>
    %168 = arith.addf %163, %167 : vector<16x128xf32>
    %c1_110 = arith.constant 1 : index
    %c0_111 = arith.constant 0 : index
    %c0_112 = arith.constant 0 : index
    %169 = vector.load %arg9[%c1_110, %c0_111, %c0_112] : memref<2x128x128xf32, #tpu.memory_space<vmem>>, vector<1x128x128xf32>
    %170 = vector.shape_cast %169 : vector<1x128x128xf32> to vector<128x128xf32>
    %cst_113 = arith.constant dense<0.000000e+00> : vector<16x128xf32>
    %171 = tpu.matmul %162, %170, %cst_113 {dimension_numbers = #tpu.dot_dimension_numbers<[1], [0], [0], [1], [0, 0, 1, 1], [], []>} : vector<16x128xf32>, vector<128x128xf32>, vector<16x128xf32> -> vector<16x128xf32>
    %172 = arith.addf %168, %171 : vector<16x128xf32>
    %c0_114 = arith.constant 0 : index
    %c0_115 = arith.constant 0 : index
    %173 = vector.load %arg10[%c0_114, %c0_115] : memref<1x128xf32, #tpu.memory_space<vmem>>, vector<1x128xf32>
    %174 = vector.broadcast %173 : vector<1x128xf32> to vector<16x128xf32>
    %175 = arith.addf %172, %174 : vector<16x128xf32>
    %176 = tpu.iota {dimensions = array<i32: 1>} : vector<16x128xi32>
    %c64_i32 = arith.constant 64 : i32
    %177 = tpu.dynamic_rotate %149 by %c64_i32 dim 1 : vector<16x128xf32>, i32 -> vector<16x128xf32>
    %c64_i32_116 = arith.constant 64 : i32
    %178 = tpu.dynamic_rotate %175 by %c64_i32_116 dim 1 : vector<16x128xf32>, i32 -> vector<16x128xf32>
    %c64_i32_117 = arith.constant 64 : i32
    %179 = vector.broadcast %c64_i32_117 : i32 to vector<16x128xi32>
    %180 = arith.cmpi slt, %176, %179 : vector<16x128xi32>
    %181 = arith.select %180, %149, %178 : vector<16x128xi1>, vector<16x128xf32>
    %182 = math.tanh %181 : vector<16x128xf32>
    %183 = arith.addf %175, %177 : vector<16x128xf32>
    %184 = arith.negf %183 : vector<16x128xf32>
    %185 = math.exp %184 : vector<16x128xf32>
    %cst_118 = arith.constant 1.000000e+00 : f32
    %186 = vector.broadcast %cst_118 : f32 to vector<16x128xf32>
    %187 = arith.addf %186, %185 : vector<16x128xf32>
    %188 = arith.divf %186, %187 : vector<16x128xf32>
    %189 = arith.mulf %182, %188 : vector<16x128xf32>
    %190 = vector.shape_cast %189 : vector<16x128xf32> to vector<2x8x128xf32>
    %cst_119 = arith.constant dense<0xFF800000> : vector<2x128xf32>
    %191 = vector.multi_reduction <maximumf>, %190, %cst_119 [1] : vector<2x8x128xf32> to vector<2x128xf32>
    %c0_120 = arith.constant 0 : index
    %c0_121 = arith.constant 0 : index
    %192 = vector.load %arg11[%c0_120, %c0_121] : memref<128x3xf32, #tpu.memory_space<vmem>>, vector<128x3xf32>
    %cst_122 = arith.constant dense<0.000000e+00> : vector<2x3xf32>
    %193 = tpu.matmul %191, %192, %cst_122 {dimension_numbers = #tpu.dot_dimension_numbers<[1], [0], [0], [1], [0, 0, 1, 1], [], []>} : vector<2x128xf32>, vector<128x3xf32>, vector<2x3xf32> -> vector<2x3xf32>
    %c0_123 = arith.constant 0 : index
    %c0_124 = arith.constant 0 : index
    %194 = vector.load %arg12[%c0_123, %c0_124] : memref<1x3xf32, #tpu.memory_space<vmem>>, vector<1x3xf32>
    %195 = vector.broadcast %194 : vector<1x3xf32> to vector<2x3xf32>
    %196 = arith.addf %193, %195 : vector<2x3xf32>
    %c0_125 = arith.constant 0 : index
    %c0_126 = arith.constant 0 : index
    %197 = vector.load %arg13[%c0_125, %c0_126] : memref<2x3xf32, #tpu.memory_space<vmem>>, vector<2x3xf32>
    tpu.vector_store %arg13[%c0_125, %c0_126], %196 {strides = array<i32>} : memref<2x3xf32, #tpu.memory_space<vmem>>, vector<2x3xf32>,
    return
  }
  func.func @transform_0(%arg0: i32) -> (i32, i32) {
    %c0_i32 = arith.constant 0 : i32
    %c0_i32_0 = arith.constant 0 : i32
    return %arg0, %c0_i32 : i32, i32
  }
  func.func @transform_1(%arg0: i32) -> (i32, i32) {
    %c0_i32 = arith.constant 0 : i32
    %c0_i32_0 = arith.constant 0 : i32
    return %arg0, %c0_i32 : i32, i32
  }
  func.func @transform_2(%arg0: i32) -> (i32, i32, i32) {
    %c0_i32 = arith.constant 0 : i32
    %c0_i32_0 = arith.constant 0 : i32
    %c0_i32_1 = arith.constant 0 : i32
    %c0_i32_2 = arith.constant 0 : i32
    return %c0_i32, %c0_i32_0, %c0_i32_1 : i32, i32, i32
  }
  func.func @transform_3(%arg0: i32) -> (i32, i32) {
    %c0_i32 = arith.constant 0 : i32
    %c0_i32_0 = arith.constant 0 : i32
    %c0_i32_1 = arith.constant 0 : i32
    return %c0_i32, %c0_i32_0 : i32, i32
  }
  func.func @transform_4(%arg0: i32) -> (i32, i32, i32) {
    %c0_i32 = arith.constant 0 : i32
    %c0_i32_0 = arith.constant 0 : i32
    %c0_i32_1 = arith.constant 0 : i32
    %c0_i32_2 = arith.constant 0 : i32
    return %c0_i32, %c0_i32_0, %c0_i32_1 : i32, i32, i32
  }
  func.func @transform_5(%arg0: i32) -> (i32, i32) {
    %c0_i32 = arith.constant 0 : i32
    %c0_i32_0 = arith.constant 0 : i32
    %c0_i32_1 = arith.constant 0 : i32
    return %c0_i32, %c0_i32_0 : i32, i32
  }
  func.func @transform_6(%arg0: i32) -> (i32, i32, i32) {
    %c0_i32 = arith.constant 0 : i32
    %c0_i32_0 = arith.constant 0 : i32
    %c0_i32_1 = arith.constant 0 : i32
    %c0_i32_2 = arith.constant 0 : i32
    return %c0_i32, %c0_i32_0, %c0_i32_1 : i32, i32, i32
  }
  func.func @transform_7(%arg0: i32) -> (i32, i32) {
    %c0_i32 = arith.constant 0 : i32
    %c0_i32_0 = arith.constant 0 : i32
    %c0_i32_1 = arith.constant 0 : i32
    return %c0_i32, %c0_i32_0 : i32, i32
  }
  func.func @transform_8(%arg0: i32) -> (i32, i32, i32) {
    %c0_i32 = arith.constant 0 : i32
    %c0_i32_0 = arith.constant 0 : i32
    %c0_i32_1 = arith.constant 0 : i32
    %c0_i32_2 = arith.constant 0 : i32
    return %c0_i32, %c0_i32_0, %c0_i32_1 : i32, i32, i32
  }
  func.func @transform_9(%arg0: i32) -> (i32, i32) {
    %c0_i32 = arith.constant 0 : i32
    %c0_i32_0 = arith.constant 0 : i32
    %c0_i32_1 = arith.constant 0 : i32
    return %c0_i32, %c0_i32_0 : i32, i32
  }
  func.func @transform_10(%arg0: i32) -> (i32, i32) {
    %c0_i32 = arith.constant 0 : i32
    %c0_i32_0 = arith.constant 0 : i32
    %c0_i32_1 = arith.constant 0 : i32
    return %c0_i32, %c0_i32_0 : i32, i32
  }
  func.func @transform_11(%arg0: i32) -> (i32, i32) {
    %c0_i32 = arith.constant 0 : i32
    %c0_i32_0 = arith.constant 0 : i32
    %c0_i32_1 = arith.constant 0 : i32
    return %c0_i32, %c0_i32_0 : i32, i32
  }
  func.func @transform_12(%arg0: i32) -> (i32, i32) {
    %c0_i32 = arith.constant 0 : i32
    %c0_i32_0 = arith.constant 0 : i32
    return %arg0, %c0_i32 : i32, i32
  }
}

</mosaic_0001>

<llo_original>
// kernel: tpu_custom_call.1
$region0: #{tpu_custom_call.1}
  #allocation0 [shape = 'u32[]', space=smem, size = 0x4, offset = 0x4, fixed_abs, tag = 'smem constant byte address 0x4 - core index']
  #allocation1 [shape = 'u32[72,128]{1,0:T(1,128)}', space=vmem, size = 0x9000, scoped, tag = 'internal scratch']
  %s0 = inlined_call_operand.vmem [shape: f32[16,40], index: 0, kind: input, shape index: {}]
  %s1 = inlined_call_operand.vmem [shape: f32[16,40], index: 1, kind: input, shape index: {}]
  %s2 = inlined_call_operand.hbm [shape: f32[7,40,128], index: 2, kind: input, shape index: {}]
  %s3 = inlined_call_operand.vmem [shape: f32[1,128], index: 3, kind: input, shape index: {}]
  %s4 = inlined_call_operand.hbm [shape: f32[7,128,128], index: 4, kind: input, shape index: {}]
  %s5 = inlined_call_operand.vmem [shape: f32[1,128], index: 5, kind: input, shape index: {}]
  %s6 = inlined_call_operand.vmem [shape: f32[2,40,128], index: 6, kind: input, shape index: {}]
  %s7 = inlined_call_operand.vmem [shape: f32[1,128], index: 7, kind: input, shape index: {}]
  %s8 = inlined_call_operand.hbm [shape: f32[2,128,128], index: 8, kind: input, shape index: {}]
  %s9 = inlined_call_operand.vmem [shape: f32[1,128], index: 9, kind: input, shape index: {}]
  %s10 = inlined_call_operand.vmem [shape: f32[128,3], index: 10, kind: input, shape index: {}]
  %s11 = inlined_call_operand.vmem [shape: f32[1,3], index: 11, kind: input, shape index: {}]
  %s12 = inlined_call_operand.hbm [shape: f32[2,3], index: 12, kind: output, shape index: {}]
  %s13 = sld [smem:[#allocation0]]
  $region70: #{tpu_custom_call.1} parent=0
    _
  %s15 = ssub.s32 1, %s13
  %s16 = scalar_select 0, %s15, %s13
  $region1: #{tpu_custom_call.1} parent=0
    #allocation2 [shape = 'u8[143360]{0}', space=vmem, size = 0x23000, scoped, tag = 'input window, operand 2, single buffered']
    #allocation3 [shape = 's32[1]{0}', space=sflag, size = 0x4, scoped, tag = 'scoped memory for tpu_custom_call.1']
    #allocation4 [shape = 's32[1]{0}', space=sflag, size = 0x4, scoped, tag = 'scoped memory for tpu_custom_call.1']
    #allocation5 [shape = 'u8[458752]{0}', space=vmem, size = 0x70000, scoped, tag = 'input window, operand 4, single buffered']
    #allocation6 [shape = 's32[1]{0}', space=sflag, size = 0x4, scoped, tag = 'scoped memory for tpu_custom_call.1']
    #allocation7 [shape = 'u8[131072]{0}', space=vmem, size = 0x20000, scoped, tag = 'input window, operand 8, single buffered']
    #allocation8 [shape = 'u8[1024]{0}', space=vmem, size = 0x400, scoped, tag = 'output window, operand 0, single buffered']
    %17 = vsyncpa [#allocation3], 0
    %18 = vsyncpa [#allocation6], 0
    %19 = vsyncpa [#allocation4], 0
    // Predicated region
    $region2: #{tpu_custom_call.1} parent=1 // pred_check
      _
    $region3: #{tpu_custom_call.1} parent=1 // pred_check_branch
      %21 = sbr.rel (0) target = $region5
    $region4: #{tpu_custom_call.1} parent=1 // pred_region
      _
    $region5: #{tpu_custom_call.1} parent=1 // pred_fallthru
      _
    // Predicated region
    $region6: #{tpu_custom_call.1} parent=1 // pred_check
      _
    $region7: #{tpu_custom_call.1} parent=1 // pred_check_branch
      %23 = sbr.rel (0) target = $region9
    $region8: #{tpu_custom_call.1} parent=1 // pred_region
      _
    $region9: #{tpu_custom_call.1} parent=1 // pred_fallthru
      _
    // Predicated region
    $region10: #{tpu_custom_call.1} parent=1 // pred_check
      _
    $region11: #{tpu_custom_call.1} parent=1 // pred_check_branch
      %25 = sbr.rel (0) target = $region13
    $region12: #{tpu_custom_call.1} parent=1 // pred_region
      %27 = vsyncadd [#allocation3], 0
      %s28 = sshll.u32 %s2, 4
      %s29 = int_to_ptr.hbm [resolvable:$true] %s28
      %s30 = sshll.u32 [#allocation2], 4
      %s31 = int_to_ptr.vmem [resolvable:$true] %s30
      %36 = dma.hbm_to_vmem [thread:$0]  %s29, 4480, %s31, [#allocation3], 128, 128, 8
    $region13: #{tpu_custom_call.1} parent=1 // pred_fallthru
      _
    // Predicated region
    $region14: #{tpu_custom_call.1} parent=1 // pred_check
      _
    $region15: #{tpu_custom_call.1} parent=1 // pred_check_branch
      %38 = sbr.rel (0) target = $region17
    $region16: #{tpu_custom_call.1} parent=1 // pred_region
      _
    $region17: #{tpu_custom_call.1} parent=1 // pred_fallthru
      _
    // Predicated region
    $region18: #{tpu_custom_call.1} parent=1 // pred_check
      _
    $region19: #{tpu_custom_call.1} parent=1 // pred_check_branch
      %40 = sbr.rel (0) target = $region21
    $region20: #{tpu_custom_call.1} parent=1 // pred_region
      %42 = vsyncadd [#allocation6], 0
      %s43 = sshll.u32 %s4, 4
      %s44 = int_to_ptr.hbm [resolvable:$true] %s43
      %s45 = sshll.u32 [#allocation5], 4
      %s46 = int_to_ptr.vmem [resolvable:$true] %s45
      %51 = dma.hbm_to_vmem [thread:$0]  %s44, 14336, %s46, [#allocation6], 128, 128, 8
    $region21: #{tpu_custom_call.1} parent=1 // pred_fallthru
      _
    // Predicated region
    $region22: #{tpu_custom_call.1} parent=1 // pred_check
      _
    $region23: #{tpu_custom_call.1} parent=1 // pred_check_branch
      %53 = sbr.rel (0) target = $region25
    $region24: #{tpu_custom_call.1} parent=1 // pred_region
      _
    $region25: #{tpu_custom_call.1} parent=1 // pred_fallthru
      _
    // Predicated region
    $region26: #{tpu_custom_call.1} parent=1 // pred_check
      _
    $region27: #{tpu_custom_call.1} parent=1 // pred_check_branch
      %55 = sbr.rel (0) target = $region29
    $region28: #{tpu_custom_call.1} parent=1 // pred_region
      _
    $region29: #{tpu_custom_call.1} parent=1 // pred_fallthru
      _
    // Predicated region
    $region30: #{tpu_custom_call.1} parent=1 // pred_check
      _
    $region31: #{tpu_custom_call.1} parent=1 // pred_check_branch
      %57 = sbr.rel (0) target = $region33
    $region32: #{tpu_custom_call.1} parent=1 // pred_region
      _
    $region33: #{tpu_custom_call.1} parent=1 // pred_fallthru
      _
    // Predicated region
    $region34: #{tpu_custom_call.1} parent=1 // pred_check
      _
    $region35: #{tpu_custom_call.1} parent=1 // pred_check_branch
      %59 = sbr.rel (0) target = $region37
    $region36: #{tpu_custom_call.1} parent=1 // pred_region
      %61 = vsyncadd [#allocation6], 0
      %s62 = sshll.u32 %s8, 4
      %s63 = int_to_ptr.hbm [resolvable:$true] %s62
      %s64 = sshll.u32 [#allocation7], 4
      %s65 = int_to_ptr.vmem [resolvable:$true] %s64
      %70 = dma.hbm_to_vmem [thread:$0]  %s63, 4096, %s65, [#allocation6], 128, 128, 8
    $region37: #{tpu_custom_call.1} parent=1 // pred_fallthru
      _
    // Predicated region
    $region38: #{tpu_custom_call.1} parent=1 // pred_check
      _
    $region39: #{tpu_custom_call.1} parent=1 // pred_check_branch
      %72 = sbr.rel (0) target = $region41
    $region40: #{tpu_custom_call.1} parent=1 // pred_region
      _
    $region41: #{tpu_custom_call.1} parent=1 // pred_fallthru
      _
    // Predicated region
    $region42: #{tpu_custom_call.1} parent=1 // pred_check
      _
    $region43: #{tpu_custom_call.1} parent=1 // pred_check_branch
      %74 = sbr.rel (0) target = $region45
    $region44: #{tpu_custom_call.1} parent=1 // pred_region
      _
    $region45: #{tpu_custom_call.1} parent=1 // pred_fallthru
      _
    // Predicated region
    $region46: #{tpu_custom_call.1} parent=1 // pred_check
      _
    $region47: #{tpu_custom_call.1} parent=1 // pred_check_branch
      %76 = sbr.rel (0) target = $region49
    $region48: #{tpu_custom_call.1} parent=1 // pred_region
      _
    $region49: #{tpu_custom_call.1} parent=1 // pred_fallthru
      _
    // Predicated region
    $region50: #{tpu_custom_call.1} parent=1 // pred_check
      _
    $region51: #{tpu_custom_call.1} parent=1 // pred_check_branch
      %78 = sbr.rel (0) target = $region53
    $region52: #{tpu_custom_call.1} parent=1 // pred_region
      %80 = dma.done [#allocation3], 4480
    $region53: #{tpu_custom_call.1} parent=1 // pred_fallthru
      _
    // Predicated region
    $region54: #{tpu_custom_call.1} parent=1 // pred_check
      _
    $region55: #{tpu_custom_call.1} parent=1 // pred_check_branch
      %82 = sbr.rel (0) target = $region57
    $region56: #{tpu_custom_call.1} parent=1 // pred_region
      %84 = dma.done [#allocation6], 14336
    $region57: #{tpu_custom_call.1} parent=1 // pred_fallthru
      _
    // Predicated region
    $region58: #{tpu_custom_call.1} parent=1 // pred_check
      _
    $region59: #{tpu_custom_call.1} parent=1 // pred_check_branch
      %86 = sbr.rel (0) target = $region61
    $region60: #{tpu_custom_call.1} parent=1 // pred_region
      %88 = dma.done [#allocation6], 4096
    $region61: #{tpu_custom_call.1} parent=1 // pred_fallthru
      _
    %v89 = vlaneseq
    %v90 = vshrl.u32 %v89, 7
    %v91 = vadd.s32 %v90, 8
    %v92 = vlaneseq
    %v93 = vand.u32 %v92, 127
    %vm94 = vcmp.lt.s32.totalorder %v90, 0
    %v95 = vsub.s32 0, %v90
    %v96 = vsel %vm94, %v95, %v90
    %v97 = vshrl.u32 %v96, 3
    %v98 = vand.u32 %v96, 7
    %v99 = vsub.s32 0, %v98
    %v100 = vsel %vm94, %v99, %v98
    %vm101 = vcmp.lt.s32.totalorder %v91, 0
    %v102 = vsub.s32 0, %v91
    %v103 = vsel %vm101, %v102, %v91
    %v104 = vshrl.u32 %v103, 3
    %v105 = vand.u32 %v103, 7
    %v106 = vsub.s32 0, %v105
    %v107 = vsel %vm101, %v106, %v105
    %vm108 = vcmp.ne.s32.totalorder %v100, 0
    %vm109 = vcmp.ne.s32.totalorder %v107, 0
    %vm110 = vcmp.lt.s32.totalorder %v100, 0
    %vm111 = vcmp.lt.s32.totalorder %v107, 0
    %vm112 = vmand %vm110, %vm108
    %vm113 = vmand %vm111, %vm109
    %v114 = vadd.s32 %v100, 8
    %v115 = vadd.s32 %v107, 8
    %v116 = vsel %vm112, %v114, %v100
    %v117 = vsel %vm113, %v115, %v107
    %v118 = vld [vmem:[%s0] sm:$0xff]
    %v119 = vld [vmem:[%s0 + $0x8] sm:$0xff]
    %v120 = vld [vmem:[%s1] sm:$0xff]
    %v121 = vld [vmem:[%s1 + $0x8] sm:$0xff]
    %v122 = vsub.s32 %v90, %v93
    %v123 = vsub.s32 %v91, %v93
    %vm124 = vcmp.eq.s32.totalorder %v122, 6
    %vm125 = vcmp.eq.s32.totalorder %v123, 6
    %vm126 = vcmp.ge.s32.totalorder %v116, 6
    %vm127 = vcmp.ge.s32.totalorder %v117, 6
    %vm128 = vmand %vm124, %vm126
    %vm129 = vmand %vm125, %vm127
    %v130 = vsel %vm128, 1.0, 0.0
    %v131 = vsel %vm129, 1.0, 0.0
    %vm132 = vcmask 130048
    %v134 = vsel %vm132, %v130, 0
    %v137 = vsel %vm132, %v131, 0
    %139 = vmatpush.msra.mxu0 0.0
    %140 = vmatpush.msra.mxu0 0.0
    %141 = vmatpush.msra.mxu0 0.0
    %142 = vmatpush.msra.mxu0 0.0
    %143 = vmatpush.msra.mxu0 0.0
    %144 = vmatpush.msra.mxu0 0.0
    %145 = vmatpush.msra.mxu0 0.0
    %146 = vmatpush.msra.mxu0 0.0
    %147 = vmatpush.msra.mxu0 0.0
    %148 = vmatpush.msra.mxu0 0.0
    %149 = vmatpush.msra.mxu0 0.0
    %150 = vmatpush.msra.mxu0 0.0
    %151 = vmatpush.msra.mxu0 0.0
    %152 = vmatpush.msra.mxu0 0.0
    %153 = vmatpush.msra.mxu0 %v119
    %154 = vmatpush.msra.mxu0 %v118
    %155 = vmatmul.f32.gmra.mxu0 %v134
    %v156 = vpop.f32.mrf.mxu0
    %v157 = vadd.f32 0.0, %v156
    %158 = vmatmul.f32.gmra.mxu0 %v137
    %v159 = vpop.f32.mrf.mxu0
    %v160 = vadd.f32 0.0, %v159
    %161 = vdwg.mxu0
    %v162 = vld [vmem:[#allocation2] sm:$0xff]
    %v163 = vld [vmem:[#allocation2 + $0x8] sm:$0xff]
    %v164 = vld [vmem:[#allocation2 + $0x10] sm:$0xff]
    %v165 = vld [vmem:[#allocation2 + $0x18] sm:$0xff]
    %v166 = vld [vmem:[#allocation2 + $0x20] sm:$0xff]
    %vm167 = vcmp.eq.s32.totalorder %v122, 5
    %vm168 = vcmp.eq.s32.totalorder %v123, 5
    %vm169 = vcmp.ge.s32.totalorder %v116, 5
    %vm170 = vcmp.ge.s32.totalorder %v117, 5
    %vm171 = vmand %vm167, %vm169
    %vm172 = vmand %vm168, %vm170
    %v173 = vsel %vm171, 1.0, 0.0
    %v174 = vsel %vm172, 1.0, 0.0
    %v176 = vsel %vm132, %v173, 0
    %v179 = vsel %vm132, %v174, 0
    %181 = vmatpush.msra.mxu0 0.0
    %182 = vmatpush.msra.mxu0 0.0
    %183 = vmatpush.msra.mxu0 0.0
    %184 = vmatpush.msra.mxu0 0.0
    %185 = vmatpush.msra.mxu0 0.0
    %186 = vmatpush.msra.mxu0 0.0
    %187 = vmatpush.msra.mxu0 0.0
    %188 = vmatpush.msra.mxu0 0.0
    %189 = vmatpush.msra.mxu0 0.0
    %190 = vmatpush.msra.mxu0 0.0
    %191 = vmatpush.msra.mxu0 0.0
    %192 = vmatpush.msra.mxu0 0.0
    %193 = vmatpush.msra.mxu0 0.0
    %194 = vmatpush.msra.mxu0 0.0
    %195 = vmatpush.msra.mxu0 %v119
    %196 = vmatpush.msra.mxu0 %v118
    %197 = vmatmul.f32.gmra.mxu0 %v176
    %v198 = vpop.f32.mrf.mxu0
    %v199 = vadd.f32 0.0, %v198
    %200 = vmatmul.f32.gmra.mxu0 %v179
    %v201 = vpop.f32.mrf.mxu0
    %v202 = vadd.f32 0.0, %v201
    %203 = vdwg.mxu0
    %s204 = scalar_lea.vmem [#allocation2], 40
    %v205 = vld [vmem:[%s204] sm:$0xff]
    %v206 = vld [vmem:[%s204 + $0x8] sm:$0xff]
    %v207 = vld [vmem:[%s204 + $0x10] sm:$0xff]
    %v208 = vld [vmem:[%s204 + $0x18] sm:$0xff]
    %v209 = vld [vmem:[%s204 + $0x20] sm:$0xff]
    %vm210 = vcmask 326656
    %v212 = vsel %vm210, %v199, 0
    %v215 = vsel %vm210, %v202, 0
    %217 = vmatpush.msra.mxu0 0.0
    %218 = vmatpush.msra.mxu0 0.0
    %219 = vmatpush.msra.mxu0 0.0
    %220 = vmatpush.msra.mxu0 0.0
    %221 = vmatpush.msra.mxu0 0.0
    %222 = vmatpush.msra.mxu0 0.0
    %223 = vmatpush.msra.mxu0 0.0
    %224 = vmatpush.msra.mxu0 0.0
    %225 = vmatpush.msra.mxu0 0.0
    %226 = vmatpush.msra.mxu0 0.0
    %227 = vmatpush.msra.mxu0 0.0
    %228 = vmatpush.msra.mxu0 %v209
    %229 = vmatpush.msra.mxu0 %v208
    %230 = vmatpush.msra.mxu0 %v207
    %231 = vmatpush.msra.mxu0 %v206
    %232 = vmatpush.msra.mxu0 %v205
    %233 = vmatmul.f32.gmra.mxu0 %v212
    %v234 = vpop.f32.mrf.mxu0
    %v235 = vadd.f32 0.0, %v234
    %236 = vmatmul.f32.gmra.mxu0 %v215
    %v237 = vpop.f32.mrf.mxu0
    %v238 = vadd.f32 0.0, %v237
    %239 = vdwg.mxu0
    %v241 = vsel %vm210, %v157, 0
    %v244 = vsel %vm210, %v160, 0
    %246 = vmatpush.msra.mxu0 0.0
    %247 = vmatpush.msra.mxu0 0.0
    %248 = vmatpush.msra.mxu0 0.0
    %249 = vmatpush.msra.mxu0 0.0
    %250 = vmatpush.msra.mxu0 0.0
    %251 = vmatpush.msra.mxu0 0.0
    %252 = vmatpush.msra.mxu0 0.0
    %253 = vmatpush.msra.mxu0 0.0
    %254 = vmatpush.msra.mxu0 0.0
    %255 = vmatpush.msra.mxu0 0.0
    %256 = vmatpush.msra.mxu0 0.0
    %257 = vmatpush.msra.mxu0 %v166
    %258 = vmatpush.msra.mxu0 %v165
    %259 = vmatpush.msra.mxu0 %v164
    %260 = vmatpush.msra.mxu0 %v163
    %261 = vmatpush.msra.mxu0 %v162
    %262 = vmatmul.f32.gmra.mxu0 %v241
    %v263 = vpop.f32.mrf.mxu0
    %v264 = vadd.f32 %v235, %v263
    %265 = vmatmul.f32.gmra.mxu0 %v244
    %v266 = vpop.f32.mrf.mxu0
    %v267 = vadd.f32 %v238, %v266
    %268 = vdwg.mxu0
    %vm269 = vcmp.eq.s32.totalorder %v122, 4
    %vm270 = vcmp.eq.s32.totalorder %v123, 4
    %vm271 = vcmp.ge.s32.totalorder %v116, 4
    %vm272 = vcmp.ge.s32.totalorder %v117, 4
    %vm273 = vmand %vm269, %vm271
    %vm274 = vmand %vm270, %vm272
    %v275 = vsel %vm273, 1.0, 0.0
    %v276 = vsel %vm274, 1.0, 0.0
    %v278 = vsel %vm132, %v275, 0
    %v281 = vsel %vm132, %v276, 0
    %283 = vmatpush.msra.mxu0 0.0
    %284 = vmatpush.msra.mxu0 0.0
    %285 = vmatpush.msra.mxu0 0.0
    %286 = vmatpush.msra.mxu0 0.0
    %287 = vmatpush.msra.mxu0 0.0
    %288 = vmatpush.msra.mxu0 0.0
    %289 = vmatpush.msra.mxu0 0.0
    %290 = vmatpush.msra.mxu0 0.0
    %291 = vmatpush.msra.mxu0 0.0
    %292 = vmatpush.msra.mxu0 0.0
    %293 = vmatpush.msra.mxu0 0.0
    %294 = vmatpush.msra.mxu0 0.0
    %295 = vmatpush.msra.mxu0 0.0
    %296 = vmatpush.msra.mxu0 0.0
    %297 = vmatpush.msra.mxu0 %v119
    %298 = vmatpush.msra.mxu0 %v118
    %299 = vmatmul.f32.gmra.mxu0 %v278
    %v300 = vpop.f32.mrf.mxu0
    %v301 = vadd.f32 0.0, %v300
    %302 = vmatmul.f32.gmra.mxu0 %v281
    %v303 = vpop.f32.mrf.mxu0
    %v304 = vadd.f32 0.0, %v303
    %305 = vdwg.mxu0
    %s306 = scalar_lea.vmem [#allocation2], 80
    %v307 = vld [vmem:[%s306] sm:$0xff]
    %v308 = vld [vmem:[%s306 + $0x8] sm:$0xff]
    %v309 = vld [vmem:[%s306 + $0x10] sm:$0xff]
    %v310 = vld [vmem:[%s306 + $0x18] sm:$0xff]
    %v311 = vld [vmem:[%s306 + $0x20] sm:$0xff]
    %v313 = vsel %vm210, %v301, 0
    %v316 = vsel %vm210, %v304, 0
    %318 = vmatpush.msra.mxu0 0.0
    %319 = vmatpush.msra.mxu0 0.0
    %320 = vmatpush.msra.mxu0 0.0
    %321 = vmatpush.msra.mxu0 0.0
    %322 = vmatpush.msra.mxu0 0.0
    %323 = vmatpush.msra.mxu0 0.0
    %324 = vmatpush.msra.mxu0 0.0
    %325 = vmatpush.msra.mxu0 0.0
    %326 = vmatpush.msra.mxu0 0.0
    %327 = vmatpush.msra.mxu0 0.0
    %328 = vmatpush.msra.mxu0 0.0
    %329 = vmatpush.msra.mxu0 %v311
    %330 = vmatpush.msra.mxu0 %v310
    %331 = vmatpush.msra.mxu0 %v309
    %332 = vmatpush.msra.mxu0 %v308
    %333 = vmatpush.msra.mxu0 %v307
    %334 = vmatmul.f32.gmra.mxu0 %v313
    %v335 = vpop.f32.mrf.mxu0
    %v336 = vadd.f32 0.0, %v335
    %337 = vmatmul.f32.gmra.mxu0 %v316
    %v338 = vpop.f32.mrf.mxu0
    %v339 = vadd.f32 0.0, %v338
    %340 = vdwg.mxu0
    %v341 = vadd.f32 %v264, %v336
    %v342 = vadd.f32 %v267, %v339
    %vm343 = vcmp.eq.s32.totalorder %v122, 3
    %vm344 = vcmp.eq.s32.totalorder %v123, 3
    %vm345 = vcmp.ge.s32.totalorder %v116, 3
    %vm346 = vcmp.ge.s32.totalorder %v117, 3
    %vm347 = vmand %vm343, %vm345
    %vm348 = vmand %vm344, %vm346
    %v349 = vsel %vm347, 1.0, 0.0
    %v350 = vsel %vm348, 1.0, 0.0
    %v352 = vsel %vm132, %v349, 0
    %v355 = vsel %vm132, %v350, 0
    %357 = vmatpush.msra.mxu0 0.0
    %358 = vmatpush.msra.mxu0 0.0
    %359 = vmatpush.msra.mxu0 0.0
    %360 = vmatpush.msra.mxu0 0.0
    %361 = vmatpush.msra.mxu0 0.0
    %362 = vmatpush.msra.mxu0 0.0
    %363 = vmatpush.msra.mxu0 0.0
    %364 = vmatpush.msra.mxu0 0.0
    %365 = vmatpush.msra.mxu0 0.0
    %366 = vmatpush.msra.mxu0 0.0
    %367 = vmatpush.msra.mxu0 0.0
    %368 = vmatpush.msra.mxu0 0.0
    %369 = vmatpush.msra.mxu0 0.0
    %370 = vmatpush.msra.mxu0 0.0
    %371 = vmatpush.msra.mxu0 %v119
    %372 = vmatpush.msra.mxu0 %v118
    %373 = vmatmul.f32.gmra.mxu0 %v352
    %v374 = vpop.f32.mrf.mxu0
    %v375 = vadd.f32 0.0, %v374
    %376 = vmatmul.f32.gmra.mxu0 %v355
    %v377 = vpop.f32.mrf.mxu0
    %v378 = vadd.f32 0.0, %v377
    %379 = vdwg.mxu0
    %s380 = scalar_lea.vmem [#allocation2], 120
    %v381 = vld [vmem:[%s380] sm:$0xff]
    %v382 = vld [vmem:[%s380 + $0x8] sm:$0xff]
    %v383 = vld [vmem:[%s380 + $0x10] sm:$0xff]
    %v384 = vld [vmem:[%s380 + $0x18] sm:$0xff]
    %v385 = vld [vmem:[%s380 + $0x20] sm:$0xff]
    %v387 = vsel %vm210, %v375, 0
    %v390 = vsel %vm210, %v378, 0
    %392 = vmatpush.msra.mxu0 0.0
    %393 = vmatpush.msra.mxu0 0.0
    %394 = vmatpush.msra.mxu0 0.0
    %395 = vmatpush.msra.mxu0 0.0
    %396 = vmatpush.msra.mxu0 0.0
    %397 = vmatpush.msra.mxu0 0.0
    %398 = vmatpush.msra.mxu0 0.0
    %399 = vmatpush.msra.mxu0 0.0
    %400 = vmatpush.msra.mxu0 0.0
    %401 = vmatpush.msra.mxu0 0.0
    %402 = vmatpush.msra.mxu0 0.0
    %403 = vmatpush.msra.mxu0 %v385
    %404 = vmatpush.msra.mxu0 %v384
    %405 = vmatpush.msra.mxu0 %v383
    %406 = vmatpush.msra.mxu0 %v382
    %407 = vmatpush.msra.mxu0 %v381
    %408 = vmatmul.f32.gmra.mxu0 %v387
    %v409 = vpop.f32.mrf.mxu0
    %v410 = vadd.f32 0.0, %v409
    %411 = vmatmul.f32.gmra.mxu0 %v390
    %v412 = vpop.f32.mrf.mxu0
    %v413 = vadd.f32 0.0, %v412
    %414 = vdwg.mxu0
    %v415 = vadd.f32 %v341, %v410
    %v416 = vadd.f32 %v342, %v413
    %vm417 = vcmp.eq.s32.totalorder %v122, 2
    %vm418 = vcmp.eq.s32.totalorder %v123, 2
    %vm419 = vcmp.ge.s32.totalorder %v116, 2
    %vm420 = vcmp.ge.s32.totalorder %v117, 2
    %vm421 = vmand %vm417, %vm419
    %vm422 = vmand %vm418, %vm420
    %v423 = vsel %vm421, 1.0, 0.0
    %v424 = vsel %vm422, 1.0, 0.0
    %v426 = vsel %vm132, %v423, 0
    %v429 = vsel %vm132, %v424, 0
    %431 = vmatpush.msra.mxu0 0.0
    %432 = vmatpush.msra.mxu0 0.0
    %433 = vmatpush.msra.mxu0 0.0
    %434 = vmatpush.msra.mxu0 0.0
    %435 = vmatpush.msra.mxu0 0.0
    %436 = vmatpush.msra.mxu0 0.0
    %437 = vmatpush.msra.mxu0 0.0
    %438 = vmatpush.msra.mxu0 0.0
    %439 = vmatpush.msra.mxu0 0.0
    %440 = vmatpush.msra.mxu0 0.0
    %441 = vmatpush.msra.mxu0 0.0
    %442 = vmatpush.msra.mxu0 0.0
    %443 = vmatpush.msra.mxu0 0.0
    %444 = vmatpush.msra.mxu0 0.0
    %445 = vmatpush.msra.mxu0 %v119
    %446 = vmatpush.msra.mxu0 %v118
    %447 = vmatmul.f32.gmra.mxu0 %v426
    %v448 = vpop.f32.mrf.mxu0
    %v449 = vadd.f32 0.0, %v448
    %450 = vmatmul.f32.gmra.mxu0 %v429
    %v451 = vpop.f32.mrf.mxu0
    %v452 = vadd.f32 0.0, %v451
    %453 = vdwg.mxu0
    %s454 = scalar_lea.vmem [#allocation2], 160
    %v455 = vld [vmem:[%s454] sm:$0xff]
    %v456 = vld [vmem:[%s454 + $0x8] sm:$0xff]
    %v457 = vld [vmem:[%s454 + $0x10] sm:$0xff]
    %v458 = vld [vmem:[%s454 + $0x18] sm:$0xff]
    %v459 = vld [vmem:[%s454 + $0x20] sm:$0xff]
    %v461 = vsel %vm210, %v449, 0
    %v464 = vsel %vm210, %v452, 0
    %466 = vmatpush.msra.mxu0 0.0
    %467 = vmatpush.msra.mxu0 0.0
    %468 = vmatpush.msra.mxu0 0.0
    %469 = vmatpush.msra.mxu0 0.0
    %470 = vmatpush.msra.mxu0 0.0
    %471 = vmatpush.msra.mxu0 0.0
    %472 = vmatpush.msra.mxu0 0.0
    %473 = vmatpush.msra.mxu0 0.0
    %474 = vmatpush.msra.mxu0 0.0
    %475 = vmatpush.msra.mxu0 0.0
    %476 = vmatpush.msra.mxu0 0.0
    %477 = vmatpush.msra.mxu0 %v459
    %478 = vmatpush.msra.mxu0 %v458
    %479 = vmatpush.msra.mxu0 %v457
    %480 = vmatpush.msra.mxu0 %v456
    %481 = vmatpush.msra.mxu0 %v455
    %482 = vmatmul.f32.gmra.mxu0 %v461
    %v483 = vpop.f32.mrf.mxu0
    %v484 = vadd.f32 0.0, %v483
    %485 = vmatmul.f32.gmra.mxu0 %v464
    %v486 = vpop.f32.mrf.mxu0
    %v487 = vadd.f32 0.0, %v486
    %488 = vdwg.mxu0
    %v489 = vadd.f32 %v415, %v484
    %v490 = vadd.f32 %v416, %v487
    %vm491 = vcmp.eq.s32.totalorder %v122, 1
    %vm492 = vcmp.eq.s32.totalorder %v123, 1
    %vm493 = vcmp.ge.s32.totalorder %v116, 1
    %vm494 = vcmp.ge.s32.totalorder %v117, 1
    %vm495 = vmand %vm491, %vm493
    %vm496 = vmand %vm492, %vm494
    %v497 = vsel %vm495, 1.0, 0.0
    %v498 = vsel %vm496, 1.0, 0.0
    %v500 = vsel %vm132, %v497, 0
    %v503 = vsel %vm132, %v498, 0
    %505 = vmatpush.msra.mxu0 0.0
    %506 = vmatpush.msra.mxu0 0.0
    %507 = vmatpush.msra.mxu0 0.0
    %508 = vmatpush.msra.mxu0 0.0
    %509 = vmatpush.msra.mxu0 0.0
    %510 = vmatpush.msra.mxu0 0.0
    %511 = vmatpush.msra.mxu0 0.0
    %512 = vmatpush.msra.mxu0 0.0
    %513 = vmatpush.msra.mxu0 0.0
    %514 = vmatpush.msra.mxu0 0.0
    %515 = vmatpush.msra.mxu0 0.0
    %516 = vmatpush.msra.mxu0 0.0
    %517 = vmatpush.msra.mxu0 0.0
    %518 = vmatpush.msra.mxu0 0.0
    %519 = vmatpush.msra.mxu0 %v119
    %520 = vmatpush.msra.mxu0 %v118
    %521 = vmatmul.f32.gmra.mxu0 %v500
    %v522 = vpop.f32.mrf.mxu0
    %v523 = vadd.f32 0.0, %v522
    %524 = vmatmul.f32.gmra.mxu0 %v503
    %v525 = vpop.f32.mrf.mxu0
    %v526 = vadd.f32 0.0, %v525
    %527 = vdwg.mxu0
    %s528 = scalar_lea.vmem [#allocation2], 200
    %v529 = vld [vmem:[%s528] sm:$0xff]
    %v530 = vld [vmem:[%s528 + $0x8] sm:$0xff]
    %v531 = vld [vmem:[%s528 + $0x10] sm:$0xff]
    %v532 = vld [vmem:[%s528 + $0x18] sm:$0xff]
    %v533 = vld [vmem:[%s528 + $0x20] sm:$0xff]
    %v535 = vsel %vm210, %v523, 0
    %v538 = vsel %vm210, %v526, 0
    %540 = vmatpush.msra.mxu0 0.0
    %541 = vmatpush.msra.mxu0 0.0
    %542 = vmatpush.msra.mxu0 0.0
    %543 = vmatpush.msra.mxu0 0.0
    %544 = vmatpush.msra.mxu0 0.0
    %545 = vmatpush.msra.mxu0 0.0
    %546 = vmatpush.msra.mxu0 0.0
    %547 = vmatpush.msra.mxu0 0.0
    %548 = vmatpush.msra.mxu0 0.0
    %549 = vmatpush.msra.mxu0 0.0
    %550 = vmatpush.msra.mxu0 0.0
    %551 = vmatpush.msra.mxu0 %v533
    %552 = vmatpush.msra.mxu0 %v532
    %553 = vmatpush.msra.mxu0 %v531
    %554 = vmatpush.msra.mxu0 %v530
    %555 = vmatpush.msra.mxu0 %v529
    %556 = vmatmul.f32.gmra.mxu0 %v535
    %v557 = vpop.f32.mrf.mxu0
    %v558 = vadd.f32 0.0, %v557
    %559 = vmatmul.f32.gmra.mxu0 %v538
    %v560 = vpop.f32.mrf.mxu0
    %v561 = vadd.f32 0.0, %v560
    %562 = vdwg.mxu0
    %v563 = vadd.f32 %v489, %v558
    %v564 = vadd.f32 %v490, %v561
    %s565 = scalar_lea.vmem [#allocation2], 240
    %v566 = vld [vmem:[%s565] sm:$0xff]
    %v567 = vld [vmem:[%s565 + $0x8] sm:$0xff]
    %v568 = vld [vmem:[%s565 + $0x10] sm:$0xff]
    %v569 = vld [vmem:[%s565 + $0x18] sm:$0xff]
    %v570 = vld [vmem:[%s565 + $0x20] sm:$0xff]
    %v572 = vsel %vm210, %v118, 0
    %v575 = vsel %vm210, %v119, 0
    %577 = vmatpush.msra.mxu0 0.0
    %578 = vmatpush.msra.mxu0 0.0
    %579 = vmatpush.msra.mxu0 0.0
    %580 = vmatpush.msra.mxu0 0.0
    %581 = vmatpush.msra.mxu0 0.0
    %582 = vmatpush.msra.mxu0 0.0
    %583 = vmatpush.msra.mxu0 0.0
    %584 = vmatpush.msra.mxu0 0.0
    %585 = vmatpush.msra.mxu0 0.0
    %586 = vmatpush.msra.mxu0 0.0
    %587 = vmatpush.msra.mxu0 0.0
    %588 = vmatpush.msra.mxu0 %v570
    %589 = vmatpush.msra.mxu0 %v569
    %590 = vmatpush.msra.mxu0 %v568
    %591 = vmatpush.msra.mxu0 %v567
    %592 = vmatpush.msra.mxu0 %v566
    %593 = vmatmul.f32.gmra.mxu0 %v572
    %v594 = vpop.f32.mrf.mxu0
    %v595 = vadd.f32 0.0, %v594
    %596 = vmatmul.f32.gmra.mxu0 %v575
    %v597 = vpop.f32.mrf.mxu0
    %v598 = vadd.f32 0.0, %v597
    %599 = vdwg.mxu0
    %v600 = vadd.f32 %v563, %v595
    %v601 = vadd.f32 %v564, %v598
    %v602 = vld [vmem:[%s3] sm:$0x1]
    %v604 = vperm.slane %v602, 0
    %v606 = vadd.f32 %v600, %v604
    %v607 = vadd.f32 %v601, %v604
    %608 = vmatpush.msra.mxu0 0.0
    %609 = vmatpush.msra.mxu0 0.0
    %610 = vmatpush.msra.mxu0 0.0
    %611 = vmatpush.msra.mxu0 0.0
    %612 = vmatpush.msra.mxu0 0.0
    %613 = vmatpush.msra.mxu0 0.0
    %614 = vmatpush.msra.mxu0 0.0
    %615 = vmatpush.msra.mxu0 0.0
    %616 = vmatpush.msra.mxu0 0.0
    %617 = vmatpush.msra.mxu0 0.0
    %618 = vmatpush.msra.mxu0 0.0
    %619 = vmatpush.msra.mxu0 0.0
    %620 = vmatpush.msra.mxu0 0.0
    %621 = vmatpush.msra.mxu0 0.0
    %622 = vmatpush.msra.mxu0 %v607
    %623 = vmatpush.msra.mxu0 %v606
    %624 = vmatmul.f32.gmra.mxu0 %v134
    %v625 = vpop.f32.mrf.mxu0
    %v626 = vadd.f32 0.0, %v625
    %627 = vmatmul.f32.gmra.mxu0 %v137
    %v628 = vpop.f32.mrf.mxu0
    %v629 = vadd.f32 0.0, %v628
    %630 = vdwg.mxu0
    %v631 = vld [vmem:[#allocation5] sm:$0xff]
    %v632 = vld [vmem:[#allocation5 + $0x8] sm:$0xff]
    %v633 = vld [vmem:[#allocation5 + $0x10] sm:$0xff]
    %v634 = vld [vmem:[#allocation5 + $0x18] sm:$0xff]
    %v635 = vld [vmem:[#allocation5 + $0x20] sm:$0xff]
    %v636 = vld [vmem:[#allocation5 + $0x28] sm:$0xff]
    %v637 = vld [vmem:[#allocation5 + $0x30] sm:$0xff]
    %v638 = vld [vmem:[#allocation5 + $0x38] sm:$0xff]
    %v639 = vld [vmem:[#allocation5 + $0x40] sm:$0xff]
    %v640 = vld [vmem:[#allocation5 + $0x48] sm:$0xff]
    %v641 = vld [vmem:[#allocation5 + $0x50] sm:$0xff]
    %v642 = vld [vmem:[#allocation5 + $0x58] sm:$0xff]
    %v643 = vld [vmem:[#allocation5 + $0x60] sm:$0xff]
    %v644 = vld [vmem:[#allocation5 + $0x68] sm:$0xff]
    %v645 = vld [vmem:[#allocation5 + $0x70] sm:$0xff]
    %v646 = vld [vmem:[#allocation5 + $0x78] sm:$0xff]
    %647 = vmatpush.msra.mxu0 0.0
    %648 = vmatpush.msra.mxu0 0.0
    %649 = vmatpush.msra.mxu0 0.0
    %650 = vmatpush.msra.mxu0 0.0
    %651 = vmatpush.msra.mxu0 0.0
    %652 = vmatpush.msra.mxu0 0.0
    %653 = vmatpush.msra.mxu0 0.0
    %654 = vmatpush.msra.mxu0 0.0
    %655 = vmatpush.msra.mxu0 0.0
    %656 = vmatpush.msra.mxu0 0.0
    %657 = vmatpush.msra.mxu0 0.0
    %658 = vmatpush.msra.mxu0 0.0
    %659 = vmatpush.msra.mxu0 0.0
    %660 = vmatpush.msra.mxu0 0.0
    %661 = vmatpush.msra.mxu0 %v607
    %662 = vmatpush.msra.mxu0 %v606
    %663 = vmatmul.f32.gmra.mxu0 %v176
    %v664 = vpop.f32.mrf.mxu0
    %v665 = vadd.f32 0.0, %v664
    %666 = vmatmul.f32.gmra.mxu0 %v179
    %v667 = vpop.f32.mrf.mxu0
    %v668 = vadd.f32 0.0, %v667
    %669 = vdwg.mxu0
    %s670 = scalar_lea.vmem [#allocation5], 128
    %v671 = vld [vmem:[%s670] sm:$0xff]
    %v672 = vld [vmem:[%s670 + $0x8] sm:$0xff]
    %v673 = vld [vmem:[%s670 + $0x10] sm:$0xff]
    %v674 = vld [vmem:[%s670 + $0x18] sm:$0xff]
    %v675 = vld [vmem:[%s670 + $0x20] sm:$0xff]
    %v676 = vld [vmem:[%s670 + $0x28] sm:$0xff]
    %v677 = vld [vmem:[%s670 + $0x30] sm:$0xff]
    %v678 = vld [vmem:[%s670 + $0x38] sm:$0xff]
    %v679 = vld [vmem:[%s670 + $0x40] sm:$0xff]
    %v680 = vld [vmem:[%s670 + $0x48] sm:$0xff]
    %v681 = vld [vmem:[%s670 + $0x50] sm:$0xff]
    %v682 = vld [vmem:[%s670 + $0x58] sm:$0xff]
    %v683 = vld [vmem:[%s670 + $0x60] sm:$0xff]
    %v684 = vld [vmem:[%s670 + $0x68] sm:$0xff]
    %v685 = vld [vmem:[%s670 + $0x70] sm:$0xff]
    %v686 = vld [vmem:[%s670 + $0x78] sm:$0xff]
    %687 = vmatpush.msra.mxu0 %v686
    %688 = vmatpush.msra.mxu0 %v685
    %689 = vmatpush.msra.mxu0 %v684
    %690 = vmatpush.msra.mxu0 %v683
    %691 = vmatpush.msra.mxu0 %v682
    %692 = vmatpush.msra.mxu0 %v681
    %693 = vmatpush.msra.mxu0 %v680
    %694 = vmatpush.msra.mxu0 %v679
    %695 = vmatpush.msra.mxu0 %v678
    %696 = vmatpush.msra.mxu0 %v677
    %697 = vmatpush.msra.mxu0 %v676
    %698 = vmatpush.msra.mxu0 %v675
    %699 = vmatpush.msra.mxu0 %v674
    %700 = vmatpush.msra.mxu0 %v673
    %701 = vmatpush.msra.mxu0 %v672
    %702 = vmatpush.msra.mxu0 %v671
    %703 = vmatmul.f32.gmra.mxu0 %v665
    %v704 = vpop.f32.mrf.mxu0
    %v705 = vadd.f32 0.0, %v704
    %706 = vmatmul.f32.gmra.mxu0 %v668
    %v707 = vpop.f32.mrf.mxu0
    %v708 = vadd.f32 0.0, %v707
    %709 = vdwg.mxu0
    %710 = vmatpush.msra.mxu0 %v646
    %711 = vmatpush.msra.mxu0 %v645
    %712 = vmatpush.msra.mxu0 %v644
    %713 = vmatpush.msra.mxu0 %v643
    %714 = vmatpush.msra.mxu0 %v642
    %715 = vmatpush.msra.mxu0 %v641
    %716 = vmatpush.msra.mxu0 %v640
    %717 = vmatpush.msra.mxu0 %v639
    %718 = vmatpush.msra.mxu0 %v638
    %719 = vmatpush.msra.mxu0 %v637
    %720 = vmatpush.msra.mxu0 %v636
    %721 = vmatpush.msra.mxu0 %v635
    %722 = vmatpush.msra.mxu0 %v634
    %723 = vmatpush.msra.mxu0 %v633
    %724 = vmatpush.msra.mxu0 %v632
    %725 = vmatpush.msra.mxu0 %v631
    %726 = vmatmul.f32.gmra.mxu0 %v626
    %v727 = vpop.f32.mrf.mxu0
    %v728 = vadd.f32 %v705, %v727
    %729 = vmatmul.f32.gmra.mxu0 %v629
    %v730 = vpop.f32.mrf.mxu0
    %v731 = vadd.f32 %v708, %v730
    %732 = vdwg.mxu0
    %733 = vmatpush.msra.mxu0 0.0
    %734 = vmatpush.msra.mxu0 0.0
    %735 = vmatpush.msra.mxu0 0.0
    %736 = vmatpush.msra.mxu0 0.0
    %737 = vmatpush.msra.mxu0 0.0
    %738 = vmatpush.msra.mxu0 0.0
    %739 = vmatpush.msra.mxu0 0.0
    %740 = vmatpush.msra.mxu0 0.0
    %741 = vmatpush.msra.mxu0 0.0
    %742 = vmatpush.msra.mxu0 0.0
    %743 = vmatpush.msra.mxu0 0.0
    %744 = vmatpush.msra.mxu0 0.0
    %745 = vmatpush.msra.mxu0 0.0
    %746 = vmatpush.msra.mxu0 0.0
    %747 = vmatpush.msra.mxu0 %v607
    %748 = vmatpush.msra.mxu0 %v606
    %749 = vmatmul.f32.gmra.mxu0 %v278
    %v750 = vpop.f32.mrf.mxu0
    %v751 = vadd.f32 0.0, %v750
    %752 = vmatmul.f32.gmra.mxu0 %v281
    %v753 = vpop.f32.mrf.mxu0
    %v754 = vadd.f32 0.0, %v753
    %755 = vdwg.mxu0
    %s756 = scalar_lea.vmem [#allocation5], 256
    %v757 = vld [vmem:[%s756] sm:$0xff]
    %v758 = vld [vmem:[%s756 + $0x8] sm:$0xff]
    %v759 = vld [vmem:[%s756 + $0x10] sm:$0xff]
    %v760 = vld [vmem:[%s756 + $0x18] sm:$0xff]
    %v761 = vld [vmem:[%s756 + $0x20] sm:$0xff]
    %v762 = vld [vmem:[%s756 + $0x28] sm:$0xff]
    %v763 = vld [vmem:[%s756 + $0x30] sm:$0xff]
    %v764 = vld [vmem:[%s756 + $0x38] sm:$0xff]
    %v765 = vld [vmem:[%s756 + $0x40] sm:$0xff]
    %v766 = vld [vmem:[%s756 + $0x48] sm:$0xff]
    %v767 = vld [vmem:[%s756 + $0x50] sm:$0xff]
    %v768 = vld [vmem:[%s756 + $0x58] sm:$0xff]
    %v769 = vld [vmem:[%s756 + $0x60] sm:$0xff]
    %v770 = vld [vmem:[%s756 + $0x68] sm:$0xff]
    %v771 = vld [vmem:[%s756 + $0x70] sm:$0xff]
    %v772 = vld [vmem:[%s756 + $0x78] sm:$0xff]
    %773 = vmatpush.msra.mxu0 %v772
    %774 = vmatpush.msra.mxu0 %v771
    %775 = vmatpush.msra.mxu0 %v770
    %776 = vmatpush.msra.mxu0 %v769
    %777 = vmatpush.msra.mxu0 %v768
    %778 = vmatpush.msra.mxu0 %v767
    %779 = vmatpush.msra.mxu0 %v766
    %780 = vmatpush.msra.mxu0 %v765
    %781 = vmatpush.msra.mxu0 %v764
    %782 = vmatpush.msra.mxu0 %v763
    %783 = vmatpush.msra.mxu0 %v762
    %784 = vmatpush.msra.mxu0 %v761
    %785 = vmatpush.msra.mxu0 %v760
    %786 = vmatpush.msra.mxu0 %v759
    %787 = vmatpush.msra.mxu0 %v758
    %788 = vmatpush.msra.mxu0 %v757
    %789 = vmatmul.f32.gmra.mxu0 %v751
    %v790 = vpop.f32.mrf.mxu0
    %v791 = vadd.f32 0.0, %v790
    %792 = vmatmul.f32.gmra.mxu0 %v754
    %v793 = vpop.f32.mrf.mxu0
    %v794 = vadd.f32 0.0, %v793
    %795 = vdwg.mxu0
    %v796 = vadd.f32 %v728, %v791
    %v797 = vadd.f32 %v731, %v794
    %798 = vmatpush.msra.mxu0 0.0
    %799 = vmatpush.msra.mxu0 0.0
    %800 = vmatpush.msra.mxu0 0.0
    %801 = vmatpush.msra.mxu0 0.0
    %802 = vmatpush.msra.mxu0 0.0
    %803 = vmatpush.msra.mxu0 0.0
    %804 = vmatpush.msra.mxu0 0.0
    %805 = vmatpush.msra.mxu0 0.0
    %806 = vmatpush.msra.mxu0 0.0
    %807 = vmatpush.msra.mxu0 0.0
    %808 = vmatpush.msra.mxu0 0.0
    %809 = vmatpush.msra.mxu0 0.0
    %810 = vmatpush.msra.mxu0 0.0
    %811 = vmatpush.msra.mxu0 0.0
    %812 = vmatpush.msra.mxu0 %v607
    %813 = vmatpush.msra.mxu0 %v606
    %814 = vmatmul.f32.gmra.mxu0 %v352
    %v815 = vpop.f32.mrf.mxu0
    %v816 = vadd.f32 0.0, %v815
    %817 = vmatmul.f32.gmra.mxu0 %v355
    %v818 = vpop.f32.mrf.mxu0
    %v819 = vadd.f32 0.0, %v818
    %820 = vdwg.mxu0
    %s821 = scalar_lea.vmem [#allocation5], 384
    %v822 = vld [vmem:[%s821] sm:$0xff]
    %v823 = vld [vmem:[%s821 + $0x8] sm:$0xff]
    %v824 = vld [vmem:[%s821 + $0x10] sm:$0xff]
    %v825 = vld [vmem:[%s821 + $0x18] sm:$0xff]
    %v826 = vld [vmem:[%s821 + $0x20] sm:$0xff]
    %v827 = vld [vmem:[%s821 + $0x28] sm:$0xff]
    %v828 = vld [vmem:[%s821 + $0x30] sm:$0xff]
    %v829 = vld [vmem:[%s821 + $0x38] sm:$0xff]
    %v830 = vld [vmem:[%s821 + $0x40] sm:$0xff]
    %v831 = vld [vmem:[%s821 + $0x48] sm:$0xff]
    %v832 = vld [vmem:[%s821 + $0x50] sm:$0xff]
    %v833 = vld [vmem:[%s821 + $0x58] sm:$0xff]
    %v834 = vld [vmem:[%s821 + $0x60] sm:$0xff]
    %v835 = vld [vmem:[%s821 + $0x68] sm:$0xff]
    %v836 = vld [vmem:[%s821 + $0x70] sm:$0xff]
    %v837 = vld [vmem:[%s821 + $0x78] sm:$0xff]
    %838 = vmatpush.msra.mxu0 %v837
    %839 = vmatpush.msra.mxu0 %v836
    %840 = vmatpush.msra.mxu0 %v835
    %841 = vmatpush.msra.mxu0 %v834
    %842 = vmatpush.msra.mxu0 %v833
    %843 = vmatpush.msra.mxu0 %v832
    %844 = vmatpush.msra.mxu0 %v831
    %845 = vmatpush.msra.mxu0 %v830
    %846 = vmatpush.msra.mxu0 %v829
    %847 = vmatpush.msra.mxu0 %v828
    %848 = vmatpush.msra.mxu0 %v827
    %849 = vmatpush.msra.mxu0 %v826
    %850 = vmatpush.msra.mxu0 %v825
    %851 = vmatpush.msra.mxu0 %v824
    %852 = vmatpush.msra.mxu0 %v823
    %853 = vmatpush.msra.mxu0 %v822
    %854 = vmatmul.f32.gmra.mxu0 %v816
    %v855 = vpop.f32.mrf.mxu0
    %v856 = vadd.f32 0.0, %v855
    %857 = vmatmul.f32.gmra.mxu0 %v819
    %v858 = vpop.f32.mrf.mxu0
    %v859 = vadd.f32 0.0, %v858
    %860 = vdwg.mxu0
    %v861 = vadd.f32 %v796, %v856
    %v862 = vadd.f32 %v797, %v859
    %863 = vmatpush.msra.mxu0 0.0
    %864 = vmatpush.msra.mxu0 0.0
    %865 = vmatpush.msra.mxu0 0.0
    %866 = vmatpush.msra.mxu0 0.0
    %867 = vmatpush.msra.mxu0 0.0
    %868 = vmatpush.msra.mxu0 0.0
    %869 = vmatpush.msra.mxu0 0.0
    %870 = vmatpush.msra.mxu0 0.0
    %871 = vmatpush.msra.mxu0 0.0
    %872 = vmatpush.msra.mxu0 0.0
    %873 = vmatpush.msra.mxu0 0.0
    %874 = vmatpush.msra.mxu0 0.0
    %875 = vmatpush.msra.mxu0 0.0
    %876 = vmatpush.msra.mxu0 0.0
    %877 = vmatpush.msra.mxu0 %v607
    %878 = vmatpush.msra.mxu0 %v606
    %879 = vmatmul.f32.gmra.mxu0 %v426
    %v880 = vpop.f32.mrf.mxu0
    %v881 = vadd.f32 0.0, %v880
    %882 = vmatmul.f32.gmra.mxu0 %v429
    %v883 = vpop.f32.mrf.mxu0
    %v884 = vadd.f32 0.0, %v883
    %885 = vdwg.mxu0
    %s886 = scalar_lea.vmem [#allocation5], 512
    %v887 = vld [vmem:[%s886] sm:$0xff]
    %v888 = vld [vmem:[%s886 + $0x8] sm:$0xff]
    %v889 = vld [vmem:[%s886 + $0x10] sm:$0xff]
    %v890 = vld [vmem:[%s886 + $0x18] sm:$0xff]
    %v891 = vld [vmem:[%s886 + $0x20] sm:$0xff]
    %v892 = vld [vmem:[%s886 + $0x28] sm:$0xff]
    %v893 = vld [vmem:[%s886 + $0x30] sm:$0xff]
    %v894 = vld [vmem:[%s886 + $0x38] sm:$0xff]
    %v895 = vld [vmem:[%s886 + $0x40] sm:$0xff]
    %v896 = vld [vmem:[%s886 + $0x48] sm:$0xff]
    %v897 = vld [vmem:[%s886 + $0x50] sm:$0xff]
    %v898 = vld [vmem:[%s886 + $0x58] sm:$0xff]
    %v899 = vld [vmem:[%s886 + $0x60] sm:$0xff]
    %v900 = vld [vmem:[%s886 + $0x68] sm:$0xff]
    %v901 = vld [vmem:[%s886 + $0x70] sm:$0xff]
    %v902 = vld [vmem:[%s886 + $0x78] sm:$0xff]
    %903 = vmatpush.msra.mxu0 %v902
    %904 = vmatpush.msra.mxu0 %v901
    %905 = vmatpush.msra.mxu0 %v900
    %906 = vmatpush.msra.mxu0 %v899
    %907 = vmatpush.msra.mxu0 %v898
    %908 = vmatpush.msra.mxu0 %v897
    %909 = vmatpush.msra.mxu0 %v896
    %910 = vmatpush.msra.mxu0 %v895
    %911 = vmatpush.msra.mxu0 %v894
    %912 = vmatpush.msra.mxu0 %v893
    %913 = vmatpush.msra.mxu0 %v892
    %914 = vmatpush.msra.mxu0 %v891
    %915 = vmatpush.msra.mxu0 %v890
    %916 = vmatpush.msra.mxu0 %v889
    %917 = vmatpush.msra.mxu0 %v888
    %918 = vmatpush.msra.mxu0 %v887
    %919 = vmatmul.f32.gmra.mxu0 %v881
    %v920 = vpop.f32.mrf.mxu0
    %v921 = vadd.f32 0.0, %v920
    %922 = vmatmul.f32.gmra.mxu0 %v884
    %v923 = vpop.f32.mrf.mxu0
    %v924 = vadd.f32 0.0, %v923
    %925 = vdwg.mxu0
    %v926 = vadd.f32 %v861, %v921
    %v927 = vadd.f32 %v862, %v924
    %928 = vmatpush.msra.mxu0 0.0
    %929 = vmatpush.msra.mxu0 0.0
    %930 = vmatpush.msra.mxu0 0.0
    %931 = vmatpush.msra.mxu0 0.0
    %932 = vmatpush.msra.mxu0 0.0
    %933 = vmatpush.msra.mxu0 0.0
    %934 = vmatpush.msra.mxu0 0.0
    %935 = vmatpush.msra.mxu0 0.0
    %936 = vmatpush.msra.mxu0 0.0
    %937 = vmatpush.msra.mxu0 0.0
    %938 = vmatpush.msra.mxu0 0.0
    %939 = vmatpush.msra.mxu0 0.0
    %940 = vmatpush.msra.mxu0 0.0
    %941 = vmatpush.msra.mxu0 0.0
    %942 = vmatpush.msra.mxu0 %v607
    %943 = vmatpush.msra.mxu0 %v606
    %944 = vmatmul.f32.gmra.mxu0 %v500
    %v945 = vpop.f32.mrf.mxu0
    %v946 = vadd.f32 0.0, %v945
    %947 = vmatmul.f32.gmra.mxu0 %v503
    %v948 = vpop.f32.mrf.mxu0
    %v949 = vadd.f32 0.0, %v948
    %950 = vdwg.mxu0
    %s951 = scalar_lea.vmem [#allocation5], 640
    %v952 = vld [vmem:[%s951] sm:$0xff]
    %v953 = vld [vmem:[%s951 + $0x8] sm:$0xff]
    %v954 = vld [vmem:[%s951 + $0x10] sm:$0xff]
    %v955 = vld [vmem:[%s951 + $0x18] sm:$0xff]
    %v956 = vld [vmem:[%s951 + $0x20] sm:$0xff]
    %v957 = vld [vmem:[%s951 + $0x28] sm:$0xff]
    %v958 = vld [vmem:[%s951 + $0x30] sm:$0xff]
    %v959 = vld [vmem:[%s951 + $0x38] sm:$0xff]
    %v960 = vld [vmem:[%s951 + $0x40] sm:$0xff]
    %v961 = vld [vmem:[%s951 + $0x48] sm:$0xff]
    %v962 = vld [vmem:[%s951 + $0x50] sm:$0xff]
    %v963 = vld [vmem:[%s951 + $0x58] sm:$0xff]
    %v964 = vld [vmem:[%s951 + $0x60] sm:$0xff]
    %v965 = vld [vmem:[%s951 + $0x68] sm:$0xff]
    %v966 = vld [vmem:[%s951 + $0x70] sm:$0xff]
    %v967 = vld [vmem:[%s951 + $0x78] sm:$0xff]
    %968 = vmatpush.msra.mxu0 %v967
    %969 = vmatpush.msra.mxu0 %v966
    %970 = vmatpush.msra.mxu0 %v965
    %971 = vmatpush.msra.mxu0 %v964
    %972 = vmatpush.msra.mxu0 %v963
    %973 = vmatpush.msra.mxu0 %v962
    %974 = vmatpush.msra.mxu0 %v961
    %975 = vmatpush.msra.mxu0 %v960
    %976 = vmatpush.msra.mxu0 %v959
    %977 = vmatpush.msra.mxu0 %v958
    %978 = vmatpush.msra.mxu0 %v957
    %979 = vmatpush.msra.mxu0 %v956
    %980 = vmatpush.msra.mxu0 %v955
    %981 = vmatpush.msra.mxu0 %v954
    %982 = vmatpush.msra.mxu0 %v953
    %983 = vmatpush.msra.mxu0 %v952
    %984 = vmatmul.f32.gmra.mxu0 %v946
    %v985 = vpop.f32.mrf.mxu0
    %v986 = vadd.f32 0.0, %v985
    %987 = vmatmul.f32.gmra.mxu0 %v949
    %v988 = vpop.f32.mrf.mxu0
    %v989 = vadd.f32 0.0, %v988
    %990 = vdwg.mxu0
    %v991 = vadd.f32 %v926, %v986
    %v992 = vadd.f32 %v927, %v989
    %s993 = scalar_lea.vmem [#allocation5], 768
    %v994 = vld [vmem:[%s993] sm:$0xff]
    %v995 = vld [vmem:[%s993 + $0x8] sm:$0xff]
    %v996 = vld [vmem:[%s993 + $0x10] sm:$0xff]
    %v997 = vld [vmem:[%s993 + $0x18] sm:$0xff]
    %v998 = vld [vmem:[%s993 + $0x20] sm:$0xff]
    %v999 = vld [vmem:[%s993 + $0x28] sm:$0xff]
    %v1000 = vld [vmem:[%s993 + $0x30] sm:$0xff]
    %v1001 = vld [vmem:[%s993 + $0x38] sm:$0xff]
    %v1002 = vld [vmem:[%s993 + $0x40] sm:$0xff]
    %v1003 = vld [vmem:[%s993 + $0x48] sm:$0xff]
    %v1004 = vld [vmem:[%s993 + $0x50] sm:$0xff]
    %v1005 = vld [vmem:[%s993 + $0x58] sm:$0xff]
    %v1006 = vld [vmem:[%s993 + $0x60] sm:$0xff]
    %v1007 = vld [vmem:[%s993 + $0x68] sm:$0xff]
    %v1008 = vld [vmem:[%s993 + $0x70] sm:$0xff]
    %v1009 = vld [vmem:[%s993 + $0x78] sm:$0xff]
    %1010 = vmatpush.msra.mxu0 %v1009
    %1011 = vmatpush.msra.mxu0 %v1008
    %1012 = vmatpush.msra.mxu0 %v1007
    %1013 = vmatpush.msra.mxu0 %v1006
    %1014 = vmatpush.msra.mxu0 %v1005
    %1015 = vmatpush.msra.mxu0 %v1004
    %1016 = vmatpush.msra.mxu0 %v1003
    %1017 = vmatpush.msra.mxu0 %v1002
    %1018 = vmatpush.msra.mxu0 %v1001
    %1019 = vmatpush.msra.mxu0 %v1000
    %1020 = vmatpush.msra.mxu0 %v999
    %1021 = vmatpush.msra.mxu0 %v998
    %1022 = vmatpush.msra.mxu0 %v997
    %1023 = vmatpush.msra.mxu0 %v996
    %1024 = vmatpush.msra.mxu0 %v995
    %1025 = vmatpush.msra.mxu0 %v994
    %1026 = vmatmul.f32.gmra.mxu0 %v606
    %v1027 = vpop.f32.mrf.mxu0
    %v1028 = vadd.f32 0.0, %v1027
    %1029 = vmatmul.f32.gmra.mxu0 %v607
    %v1030 = vpop.f32.mrf.mxu0
    %v1031 = vadd.f32 0.0, %v1030
    %1032 = vdwg.mxu0
    %v1033 = vadd.f32 %v991, %v1028
    %v1034 = vadd.f32 %v992, %v1031
    %v1035 = vld [vmem:[%s5] sm:$0x1]
    %v1037 = vperm.slane %v1035, 0
    %v1039 = vadd.f32 %v1033, %v1037
    %v1040 = vadd.f32 %v1034, %v1037
    %1041 = vmatpush.msra.mxu0 0.0
    %1042 = vmatpush.msra.mxu0 0.0
    %1043 = vmatpush.msra.mxu0 0.0
    %1044 = vmatpush.msra.mxu0 0.0
    %1045 = vmatpush.msra.mxu0 0.0
    %1046 = vmatpush.msra.mxu0 0.0
    %1047 = vmatpush.msra.mxu0 0.0
    %1048 = vmatpush.msra.mxu0 0.0
    %1049 = vmatpush.msra.mxu0 0.0
    %1050 = vmatpush.msra.mxu0 0.0
    %1051 = vmatpush.msra.mxu0 0.0
    %1052 = vmatpush.msra.mxu0 0.0
    %1053 = vmatpush.msra.mxu0 0.0
    %1054 = vmatpush.msra.mxu0 0.0
    %1055 = vmatpush.msra.mxu0 %v121
    %1056 = vmatpush.msra.mxu0 %v120
    %1057 = vmatmul.f32.gmra.mxu0 %v500
    %v1058 = vpop.f32.mrf.mxu0
    %v1059 = vadd.f32 0.0, %v1058
    %1060 = vmatmul.f32.gmra.mxu0 %v503
    %v1061 = vpop.f32.mrf.mxu0
    %v1062 = vadd.f32 0.0, %v1061
    %1063 = vdwg.mxu0
    %v1064 = vld [vmem:[%s6] sm:$0xff]
    %v1065 = vld [vmem:[%s6 + $0x8] sm:$0xff]
    %v1066 = vld [vmem:[%s6 + $0x10] sm:$0xff]
    %v1067 = vld [vmem:[%s6 + $0x18] sm:$0xff]
    %v1068 = vld [vmem:[%s6 + $0x20] sm:$0xff]
    %s1069 = scalar_lea.vmem %s6, 40
    %v1070 = vld [vmem:[%s1069] sm:$0xff]
    %v1071 = vld [vmem:[%s1069 + $0x8] sm:$0xff]
    %v1072 = vld [vmem:[%s1069 + $0x10] sm:$0xff]
    %v1073 = vld [vmem:[%s1069 + $0x18] sm:$0xff]
    %v1074 = vld [vmem:[%s1069 + $0x20] sm:$0xff]
    %v1076 = vsel %vm210, %v120, 0
    %v1079 = vsel %vm210, %v121, 0
    %1081 = vmatpush.msra.mxu0 0.0
    %1082 = vmatpush.msra.mxu0 0.0
    %1083 = vmatpush.msra.mxu0 0.0
    %1084 = vmatpush.msra.mxu0 0.0
    %1085 = vmatpush.msra.mxu0 0.0
    %1086 = vmatpush.msra.mxu0 0.0
    %1087 = vmatpush.msra.mxu0 0.0
    %1088 = vmatpush.msra.mxu0 0.0
    %1089 = vmatpush.msra.mxu0 0.0
    %1090 = vmatpush.msra.mxu0 0.0
    %1091 = vmatpush.msra.mxu0 0.0
    %1092 = vmatpush.msra.mxu0 %v1074
    %1093 = vmatpush.msra.mxu0 %v1073
    %1094 = vmatpush.msra.mxu0 %v1072
    %1095 = vmatpush.msra.mxu0 %v1071
    %1096 = vmatpush.msra.mxu0 %v1070
    %1097 = vmatmul.f32.gmra.mxu0 %v1076
    %v1098 = vpop.f32.mrf.mxu0
    %v1099 = vadd.f32 0.0, %v1098
    %1100 = vmatmul.f32.gmra.mxu0 %v1079
    %v1101 = vpop.f32.mrf.mxu0
    %v1102 = vadd.f32 0.0, %v1101
    %1103 = vdwg.mxu0
    %v1105 = vsel %vm210, %v1059, 0
    %v1108 = vsel %vm210, %v1062, 0
    %1110 = vmatpush.msra.mxu0 0.0
    %1111 = vmatpush.msra.mxu0 0.0
    %1112 = vmatpush.msra.mxu0 0.0
    %1113 = vmatpush.msra.mxu0 0.0
    %1114 = vmatpush.msra.mxu0 0.0
    %1115 = vmatpush.msra.mxu0 0.0
    %1116 = vmatpush.msra.mxu0 0.0
    %1117 = vmatpush.msra.mxu0 0.0
    %1118 = vmatpush.msra.mxu0 0.0
    %1119 = vmatpush.msra.mxu0 0.0
    %1120 = vmatpush.msra.mxu0 0.0
    %1121 = vmatpush.msra.mxu0 %v1068
    %1122 = vmatpush.msra.mxu0 %v1067
    %1123 = vmatpush.msra.mxu0 %v1066
    %1124 = vmatpush.msra.mxu0 %v1065
    %1125 = vmatpush.msra.mxu0 %v1064
    %1126 = vmatmul.f32.gmra.mxu0 %v1105
    %v1127 = vpop.f32.mrf.mxu0
    %v1128 = vadd.f32 %v1099, %v1127
    %1129 = vmatmul.f32.gmra.mxu0 %v1108
    %v1130 = vpop.f32.mrf.mxu0
    %v1131 = vadd.f32 %v1102, %v1130
    %1132 = vdwg.mxu0
    %v1133 = vld [vmem:[%s7] sm:$0x1]
    %v1135 = vperm.slane %v1133, 0
    %v1137 = vadd.f32 %v1128, %v1135
    %v1138 = vadd.f32 %v1131, %v1135
    %1139 = vmatpush.msra.mxu0 0.0
    %1140 = vmatpush.msra.mxu0 0.0
    %1141 = vmatpush.msra.mxu0 0.0
    %1142 = vmatpush.msra.mxu0 0.0
    %1143 = vmatpush.msra.mxu0 0.0
    %1144 = vmatpush.msra.mxu0 0.0
    %1145 = vmatpush.msra.mxu0 0.0
    %1146 = vmatpush.msra.mxu0 0.0
    %1147 = vmatpush.msra.mxu0 0.0
    %1148 = vmatpush.msra.mxu0 0.0
    %1149 = vmatpush.msra.mxu0 0.0
    %1150 = vmatpush.msra.mxu0 0.0
    %1151 = vmatpush.msra.mxu0 0.0
    %1152 = vmatpush.msra.mxu0 0.0
    %1153 = vmatpush.msra.mxu0 %v1138
    %1154 = vmatpush.msra.mxu0 %v1137
    %1155 = vmatmul.f32.gmra.mxu0 %v500
    %v1156 = vpop.f32.mrf.mxu0
    %v1157 = vadd.f32 0.0, %v1156
    %1158 = vmatmul.f32.gmra.mxu0 %v503
    %v1159 = vpop.f32.mrf.mxu0
    %v1160 = vadd.f32 0.0, %v1159
    %1161 = vdwg.mxu0
    %v1162 = vld [vmem:[#allocation7] sm:$0xff]
    %v1163 = vld [vmem:[#allocation7 + $0x8] sm:$0xff]
    %v1164 = vld [vmem:[#allocation7 + $0x10] sm:$0xff]
    %v1165 = vld [vmem:[#allocation7 + $0x18] sm:$0xff]
    %v1166 = vld [vmem:[#allocation7 + $0x20] sm:$0xff]
    %v1167 = vld [vmem:[#allocation7 + $0x28] sm:$0xff]
    %v1168 = vld [vmem:[#allocation7 + $0x30] sm:$0xff]
    %v1169 = vld [vmem:[#allocation7 + $0x38] sm:$0xff]
    %v1170 = vld [vmem:[#allocation7 + $0x40] sm:$0xff]
    %v1171 = vld [vmem:[#allocation7 + $0x48] sm:$0xff]
    %v1172 = vld [vmem:[#allocation7 + $0x50] sm:$0xff]
    %v1173 = vld [vmem:[#allocation7 + $0x58] sm:$0xff]
    %v1174 = vld [vmem:[#allocation7 + $0x60] sm:$0xff]
    %v1175 = vld [vmem:[#allocation7 + $0x68] sm:$0xff]
    %v1176 = vld [vmem:[#allocation7 + $0x70] sm:$0xff]
    %v1177 = vld [vmem:[#allocation7 + $0x78] sm:$0xff]
    %s1178 = scalar_lea.vmem [#allocation7], 128
    %v1179 = vld [vmem:[%s1178] sm:$0xff]
    %v1180 = vld [vmem:[%s1178 + $0x8] sm:$0xff]
    %v1181 = vld [vmem:[%s1178 + $0x10] sm:$0xff]
    %v1182 = vld [vmem:[%s1178 + $0x18] sm:$0xff]
    %v1183 = vld [vmem:[%s1178 + $0x20] sm:$0xff]
    %v1184 = vld [vmem:[%s1178 + $0x28] sm:$0xff]
    %v1185 = vld [vmem:[%s1178 + $0x30] sm:$0xff]
    %v1186 = vld [vmem:[%s1178 + $0x38] sm:$0xff]
    %v1187 = vld [vmem:[%s1178 + $0x40] sm:$0xff]
    %v1188 = vld [vmem:[%s1178 + $0x48] sm:$0xff]
    %v1189 = vld [vmem:[%s1178 + $0x50] sm:$0xff]
    %v1190 = vld [vmem:[%s1178 + $0x58] sm:$0xff]
    %v1191 = vld [vmem:[%s1178 + $0x60] sm:$0xff]
    %v1192 = vld [vmem:[%s1178 + $0x68] sm:$0xff]
    %v1193 = vld [vmem:[%s1178 + $0x70] sm:$0xff]
    %v1194 = vld [vmem:[%s1178 + $0x78] sm:$0xff]
    %1195 = vmatpush.msra.mxu0 %v1194
    %1196 = vmatpush.msra.mxu0 %v1193
    %1197 = vmatpush.msra.mxu0 %v1192
    %1198 = vmatpush.msra.mxu0 %v1191
    %1199 = vmatpush.msra.mxu0 %v1190
    %1200 = vmatpush.msra.mxu0 %v1189
    %1201 = vmatpush.msra.mxu0 %v1188
    %1202 = vmatpush.msra.mxu0 %v1187
    %1203 = vmatpush.msra.mxu0 %v1186
    %1204 = vmatpush.msra.mxu0 %v1185
    %1205 = vmatpush.msra.mxu0 %v1184
    %1206 = vmatpush.msra.mxu0 %v1183
    %1207 = vmatpush.msra.mxu0 %v1182
    %1208 = vmatpush.msra.mxu0 %v1181
    %1209 = vmatpush.msra.mxu0 %v1180
    %1210 = vmatpush.msra.mxu0 %v1179
    %1211 = vmatmul.f32.gmra.mxu0 %v1137
    %v1212 = vpop.f32.mrf.mxu0
    %v1213 = vadd.f32 0.0, %v1212
    %1214 = vmatmul.f32.gmra.mxu0 %v1138
    %v1215 = vpop.f32.mrf.mxu0
    %v1216 = vadd.f32 0.0, %v1215
    %1217 = vdwg.mxu0
    %1218 = vmatpush.msra.mxu0 %v1177
    %1219 = vmatpush.msra.mxu0 %v1176
    %1220 = vmatpush.msra.mxu0 %v1175
    %1221 = vmatpush.msra.mxu0 %v1174
    %1222 = vmatpush.msra.mxu0 %v1173
    %1223 = vmatpush.msra.mxu0 %v1172
    %1224 = vmatpush.msra.mxu0 %v1171
    %1225 = vmatpush.msra.mxu0 %v1170
    %1226 = vmatpush.msra.mxu0 %v1169
    %1227 = vmatpush.msra.mxu0 %v1168
    %1228 = vmatpush.msra.mxu0 %v1167
    %1229 = vmatpush.msra.mxu0 %v1166
    %1230 = vmatpush.msra.mxu0 %v1165
    %1231 = vmatpush.msra.mxu0 %v1164
    %1232 = vmatpush.msra.mxu0 %v1163
    %1233 = vmatpush.msra.mxu0 %v1162
    %1234 = vmatmul.f32.gmra.mxu0 %v1157
    %v1235 = vpop.f32.mrf.mxu0
    %v1236 = vadd.f32 %v1213, %v1235
    %1237 = vmatmul.f32.gmra.mxu0 %v1160
    %v1238 = vpop.f32.mrf.mxu0
    %v1239 = vadd.f32 %v1216, %v1238
    %1240 = vdwg.mxu0
    %v1241 = vld [vmem:[%s9] sm:$0x1]
    %v1243 = vperm.slane %v1241, 0
    %v1245 = vadd.f32 %v1236, %v1243
    %v1246 = vadd.f32 %v1239, %v1243
    %1247 = vrot.lane.b32.xlu0 %v1039, 64
    %v1248 = vpop.permute.xlu0 %1247
    %1249 = vrot.lane.b32.xlu0 %v1040, 64
    %v1250 = vpop.permute.xlu0 %1249
    %1251 = vrot.lane.b32.xlu0 %v1245, 64
    %v1252 = vpop.permute.xlu0 %1251
    %1253 = vrot.lane.b32.xlu0 %v1246, 64
    %v1254 = vpop.permute.xlu0 %1253
    %vm1255 = vcmp.lt.s32.totalorder %v93, 64
    %v1256 = vsel %vm1255, %v1039, %v1252
    %v1257 = vsel %vm1255, %v1040, %v1254
    %v1258 = vtanh.pop %v1256
    %v1259 = vtanh.pop %v1257
    %v1260 = vadd.f32 %v1245, %v1248
    %v1261 = vadd.f32 %v1246, %v1250
    %v1262 = vxor.u32 %v1260, 2147483648
    %v1263 = vxor.u32 %v1261, 2147483648
    %v1264 = vmul.f32 %v1262, 1.442695
    %v1265 = vpow.pop %v1264
    %v1266 = vmul.f32 %v1263, 1.442695
    %v1267 = vpow.pop %v1266
    %v1268 = vadd.f32 %v1265, 1.0
    %v1269 = vadd.f32 %v1267, 1.0
    %v1270 = vrcp.pop %v1268
    %v1271 = vmul.f32 %v1268, %v1270
    %v1272 = vsub.f32 1.0, %v1271
    %v1273 = vmul.f32 %v1270, %v1272
    %v1274 = vadd.f32 %v1270, %v1273
    %vm1275 = vweird.f32 %v1268
    %vm1276 = vweird.f32 %v1270
    %vm1277 = vmor %vm1275, %vm1276
    %v1278 = vsel %vm1277, %v1270, %v1274
    %v1279 = vand.u32 2147483647, %v1268
    %vm1280 = vcmp.eq.f32.partialorder %v1279, 8.507059e+37
    %v1281 = vand.u32 %v1268, 2147483648
    %v1282 = vor.u32 1.1754944e-38, %v1281
    %v1283 = vsel %vm1280, %v1282, %v1278
    %v1284 = vmul.f32 1.0, %v1283
    %v1285 = vrcp.pop %v1269
    %v1286 = vmul.f32 %v1269, %v1285
    %v1287 = vsub.f32 1.0, %v1286
    %v1288 = vmul.f32 %v1285, %v1287
    %v1289 = vadd.f32 %v1285, %v1288
    %vm1290 = vweird.f32 %v1269
    %vm1291 = vweird.f32 %v1285
    %vm1292 = vmor %vm1290, %vm1291
    %v1293 = vsel %vm1292, %v1285, %v1289
    %v1294 = vand.u32 2147483647, %v1269
    %vm1295 = vcmp.eq.f32.partialorder %v1294, 8.507059e+37
    %v1296 = vand.u32 %v1269, 2147483648
    %v1297 = vor.u32 1.1754944e-38, %v1296
    %v1298 = vsel %vm1295, %v1297, %v1293
    %v1299 = vmul.f32 1.0, %v1298
    %v1300 = vmul.f32 %v1258, %v1284
    %v1301 = vmul.f32 %v1259, %v1299
    %v1302 = vrot.slane %v1300, 4
    %v1303 = vmax.f32 %v1300, %v1302
    %v1304 = vrot.slane %v1303, 2
    %v1305 = vmax.f32 %v1303, %v1304
    %v1306 = vrot.slane %v1305, 1
    %v1307 = vmax.f32 %v1305, %v1306
    %v1308 = vrot.slane %v1301, 4
    %v1309 = vmax.f32 %v1301, %v1308
    %v1310 = vrot.slane %v1309, 2
    %v1311 = vmax.f32 %v1309, %v1310
    %v1312 = vrot.slane %v1311, 1
    %v1313 = vmax.f32 %v1311, %v1312
    %v1314 = vld [vmem:[%s10] sm:$0xff]
    %v1315 = vld [vmem:[%s10 + $0x8] sm:$0xff]
    %v1316 = vld [vmem:[%s10 + $0x10] sm:$0xff]
    %v1317 = vld [vmem:[%s10 + $0x18] sm:$0xff]
    %v1318 = vld [vmem:[%s10 + $0x20] sm:$0xff]
    %v1319 = vld [vmem:[%s10 + $0x28] sm:$0xff]
    %v1320 = vld [vmem:[%s10 + $0x30] sm:$0xff]
    %v1321 = vld [vmem:[%s10 + $0x38] sm:$0xff]
    %v1322 = vld [vmem:[%s10 + $0x40] sm:$0xff]
    %v1323 = vld [vmem:[%s10 + $0x48] sm:$0xff]
    %v1324 = vld [vmem:[%s10 + $0x50] sm:$0xff]
    %v1325 = vld [vmem:[%s10 + $0x58] sm:$0xff]
    %v1326 = vld [vmem:[%s10 + $0x60] sm:$0xff]
    %v1327 = vld [vmem:[%s10 + $0x68] sm:$0xff]
    %v1328 = vld [vmem:[%s10 + $0x70] sm:$0xff]
    %v1329 = vld [vmem:[%s10 + $0x78] sm:$0xff]
    %v1330 = vld [vmem:[%s11] sm:$0x1]
    %v1332 = vperm.slane %v1330, 0
    %vm1336 = vcmask 1041409
    %v1337 = vsel %vm1336, %v1313, %v1307
    %1339 = vmatpush.msra.mxu0 %v1329
    %1340 = vmatpush.msra.mxu0 %v1328
    %1341 = vmatpush.msra.mxu0 %v1327
    %1342 = vmatpush.msra.mxu0 %v1326
    %1343 = vmatpush.msra.mxu0 %v1325
    %1344 = vmatpush.msra.mxu0 %v1324
    %1345 = vmatpush.msra.mxu0 %v1323
    %1346 = vmatpush.msra.mxu0 %v1322
    %1347 = vmatpush.msra.mxu0 %v1321
    %1348 = vmatpush.msra.mxu0 %v1320
    %1349 = vmatpush.msra.mxu0 %v1319
    %1350 = vmatpush.msra.mxu0 %v1318
    %1351 = vmatpush.msra.mxu0 %v1317
    %1352 = vmatpush.msra.mxu0 %v1316
    %1353 = vmatpush.msra.mxu0 %v1315
    %1354 = vmatpush.msra.mxu0 %v1314
    %1355 = vmatmul.f32.gmra.mxu0 %v1337
    %v1356 = vpop.f32.mrf.mxu0
    %v1357 = vadd.f32 %v1332, %v1356
    %1358 = vdwg.mxu0
    %vm1359 = vcmask 17408
    %1360 = vst.msk [vmem:[#allocation8] sm:$0x3] %vm1359, %v1357
    // Predicated region
    $region62: #{tpu_custom_call.1} parent=1 // pred_check
      _
    $region63: #{tpu_custom_call.1} parent=1 // pred_check_branch
      %1362 = sbr.rel (0) target = $region65
    $region64: #{tpu_custom_call.1} parent=1 // pred_region
      %1364 = vsyncadd [#allocation4], 0
      %s1366 = sshll.u32 [#allocation8], 4
      %s1367 = int_to_ptr.vmem [resolvable:$true] %s1366
      %s1368 = sshll.u32 %s12, 4
      %s1369 = int_to_ptr.hbm [resolvable:$true] %s1368
      %1371 = dma.vmem_to_hbm [thread:$0]  %s1367, 32, %s1369, [#allocation4]
    $region65: #{tpu_custom_call.1} parent=1 // pred_fallthru
      _
    // Predicated region
    $region66: #{tpu_custom_call.1} parent=1 // pred_check
      _
    $region67: #{tpu_custom_call.1} parent=1 // pred_check_branch
      %1373 = sbr.rel (0) target = $region69
    $region68: #{tpu_custom_call.1} parent=1 // pred_region
      %1375 = dma.done [#allocation4], 32
    $region69: #{tpu_custom_call.1} parent=1 // pred_fallthru
      _
    %1376 = vsyncpa [#allocation3], 1
    %1377 = vsyncpa [#allocation6], 1
    %1378 = vsyncpa [#allocation4], 1

</llo_original>
